<compile_context>
chip_gen: v7x
topology: tpu7x:2x2x1
jax: 0.10.0
libtpu: 0.0.40
codegen_flags: <defaults>
</compile_context>

<pallas_src>
import jax
import jax.numpy as jnp
from jax.experimental import pallas as pl
from jax.experimental.pallas import tpu as pltpu


def mlp_kernel(x_ref,
               w1_ref, b1_ref,
               w2_ref, b2_ref,
               w3_ref, b3_ref,
               w4_ref, b4_ref,
               o_ref):
    # Layer 1: Linear(64(pad) -> 512) + ReLU   (Dropout(0.05) identity in eval)
    h = jnp.dot(x_ref[...], w1_ref[...], preferred_element_type=jnp.float32)
    h = jnp.maximum(h + b1_ref[...], 0.0)

    # Layer 2: Linear(512 -> 256) + ReLU       (Dropout(0.02) identity in eval)
    h = jnp.dot(h.astype(jnp.bfloat16), w2_ref[...],
                preferred_element_type=jnp.float32)
    h = jnp.maximum(h + b2_ref[...], 0.0)

    # Layer 3: Linear(256 -> 128) + ReLU
    h = jnp.dot(h.astype(jnp.bfloat16), w3_ref[...],
                preferred_element_type=jnp.float32)
    h = jnp.maximum(h + b3_ref[...], 0.0)

    # Layer 4: Linear(128 -> 28) with eval-mode BatchNorm folded into w4'/b4'
    logits = jnp.dot(h.astype(jnp.bfloat16), w4_ref[...],
                     preferred_element_type=jnp.float32)
    logits = logits + b4_ref[...]

    # Softmax over dim=1 (feature axis), f32 math
    m = jnp.max(logits, axis=1, keepdims=True)
    e = jnp.exp(logits - m)
    o_ref[...] = e * pl.reciprocal(jnp.sum(e, axis=1, keepdims=True), approx=True)


def net_forward(x, params, *, tb=256):
    (w1, b1, w2, b2, w3, b3, gamma, beta, rmean, rvar, w4, b4) = params
    B, F = x.shape
    out_dim = w4.shape[1]

    # ---- one-time wrapper-side parameter prep (pure precompute) ----
    # Fold eval-mode BatchNorm1d(128) into Linear4:
    #   BN(h) = h * s + t,  s = gamma/sqrt(var+eps),  t = beta - mean*s
    #   BN(h) @ w4 + b4 = h @ (diag(s) @ w4) + (t @ w4 + b4)
    eps = 1e-5
    s = gamma * jax.lax.rsqrt(rvar + eps)          # (1, 128)
    t = beta - rmean * s                           # (1, 128)
    w4f = s.reshape(-1, 1) * w4                    # (128, 28)
    b4f = t @ w4 + b4                              # (1, 28)

    # Pad feature dim 63 -> 64 (zero columns in x, zero rows in w1)
    fp = 64
    x_p = jnp.pad(x, ((0, 0), (0, fp - F)))
    w1_p = jnp.pad(w1, ((0, fp - F), (0, 0)))

    # Pad batch to a multiple of the batch tile
    nb = pl.cdiv(B, tb)
    bp = nb * tb
    x_p = jnp.pad(x_p, ((0, bp - B), (0, 0)))

    # bf16 MXU operands (f32 accumulation inside the kernel)
    x_bf = x_p.astype(jnp.bfloat16)
    w1_bf = w1_p.astype(jnp.bfloat16)
    w2_bf = w2.astype(jnp.bfloat16)
    w3_bf = w3.astype(jnp.bfloat16)
    w4_bf = w4f.astype(jnp.bfloat16)

    def resident(a):
        # full-array block, same tile every grid step -> stays in VMEM
        return pl.BlockSpec(a.shape, lambda i: (0,) * a.ndim)

    in_specs = [
        pl.BlockSpec((tb, fp), lambda i: (i, 0)),   # x: streamed over batch
        resident(w1_bf), resident(b1),
        resident(w2_bf), resident(b2),
        resident(w3_bf), resident(b3),
        resident(w4_bf), resident(b4f),
    ]

    out = pl.pallas_call(
        mlp_kernel,
        out_shape=jax.ShapeDtypeStruct((bp, out_dim), jnp.float32),
        grid_spec=pltpu.PrefetchScalarGridSpec(
            num_scalar_prefetch=0,
            grid=(nb,),
            in_specs=in_specs,
            out_specs=pl.BlockSpec((tb, out_dim), lambda i: (i, 0)),
        ),
        compiler_params=pltpu.CompilerParams(
            dimension_semantics=("parallel",),
        ),
    )(x_bf, w1_bf, b1, w2_bf, b2, w3_bf, b3, w4_bf, b4f)

    return out[:B]


def net_reference(x, params):
    """Pure-JAX f32 reference of the eval-mode forward pass."""
    (w1, b1, w2, b2, w3, b3, gamma, beta, rmean, rvar, w4, b4) = params
    h = jnp.maximum(x @ w1 + b1, 0.0)
    h = jnp.maximum(h @ w2 + b2, 0.0)
    h = jnp.maximum(h @ w3 + b3, 0.0)
    h = (h - rmean) * jax.lax.rsqrt(rvar + 1e-5) * gamma + beta
    logits = h @ w4 + b4
    return jax.nn.softmax(logits, axis=1)


def init_params(key):
    """Deterministic init mimicking PyTorch Linear defaults (U(-1/sqrt(fan_in), +1/sqrt(fan_in)))."""
    def linear(key, fan_in, fan_out):
        kw, kb = jax.random.split(key)
        bound = 1.0 / jnp.sqrt(fan_in)
        # store W as (in, out) so the kernel does x @ W (equiv. to PyTorch x @ W.T)
        w = jax.random.uniform(kw, (fan_in, fan_out), jnp.float32, -bound, bound)
        b = jax.random.uniform(kb, (1, fan_out), jnp.float32, -bound, bound)
        return w, b

    k1, k2, k3, k4 = jax.random.split(key, 4)
    w1, b1 = linear(k1, 63, 512)
    w2, b2 = linear(k2, 512, 256)
    w3, b3 = linear(k3, 256, 128)
    w4, b4 = linear(k4, 128, 28)

    # BatchNorm1d(128) defaults
    gamma = jnp.ones((1, 128), jnp.float32)
    beta = jnp.zeros((1, 128), jnp.float32)
    rmean = jnp.zeros((1, 128), jnp.float32)
    rvar = jnp.ones((1, 128), jnp.float32)

    return (w1, b1, w2, b2, w3, b3, gamma, beta, rmean, rvar, w4, b4)


if __name__ == "__main__":
    key = jax.random.PRNGKey(0)
    kx, kp = jax.random.split(key)

    B = 8  # small batch (padded to the 256-row tile internally)
    x = jax.random.normal(kx, (B, 63), jnp.float32)
    params = init_params(kp)

    out = net_forward(x, params)
    out = jax.block_until_ready(out)

    # sanity checks: shape, softmax rows sum to ~1, matches f32 reference
    assert out.shape == (B, 28)
    assert bool(jnp.all(jnp.abs(jnp.sum(out, axis=1) - 1.0) < 1e-2))
    ref = net_reference(x, params)
    assert bool(jnp.max(jnp.abs(out - ref)) < 3e-2)  # bf16 weights vs f32 ref

    print("KERNEL_OK")
</pallas_src>

<mosaic_0001>
module attributes {stable_mosaic.version = 11 : i64} {
  func.func @mlp_kernel(%arg0: i32, %arg1: memref<256x64xbf16, #tpu.memory_space<vmem>>, %arg2: memref<64x512xbf16, #tpu.memory_space<vmem>>, %arg3: memref<1x512xf32, #tpu.memory_space<vmem>>, %arg4: memref<512x256xbf16, #tpu.memory_space<vmem>>, %arg5: memref<1x256xf32, #tpu.memory_space<vmem>>, %arg6: memref<256x128xbf16, #tpu.memory_space<vmem>>, %arg7: memref<1x128xf32, #tpu.memory_space<vmem>>, %arg8: memref<128x28xbf16, #tpu.memory_space<vmem>>, %arg9: memref<1x28xf32, #tpu.memory_space<vmem>>, %arg10: memref<256x28xf32, #tpu.memory_space<vmem>>) attributes {dimension_semantics = [#tpu.dimension_semantics<parallel>], iteration_bounds = array<i64: 1>, scalar_prefetch = 0 : i64, scratch_operands = 0 : i64, tpu.core_type = #tpu.core_type<tc>, window_params = [{transform_indices = @transform_0, window_bounds = array<i64: 256, 64>}, {pipeline_mode = #tpu.pipeline_mode<synchronous>, transform_indices = @transform_1, window_bounds = array<i64: 64, 512>}, {pipeline_mode = #tpu.pipeline_mode<synchronous>, transform_indices = @transform_2, window_bounds = array<i64: 1, 512>}, {pipeline_mode = #tpu.pipeline_mode<synchronous>, transform_indices = @transform_3, window_bounds = array<i64: 512, 256>}, {pipeline_mode = #tpu.pipeline_mode<synchronous>, transform_indices = @transform_4, window_bounds = array<i64: 1, 256>}, {pipeline_mode = #tpu.pipeline_mode<synchronous>, transform_indices = @transform_5, window_bounds = array<i64: 256, 128>}, {pipeline_mode = #tpu.pipeline_mode<synchronous>, transform_indices = @transform_6, window_bounds = array<i64: 1, 128>}, {pipeline_mode = #tpu.pipeline_mode<synchronous>, transform_indices = @transform_7, window_bounds = array<i64: 128, 28>}, {pipeline_mode = #tpu.pipeline_mode<synchronous>, transform_indices = @transform_8, window_bounds = array<i64: 1, 28>}, {transform_indices = @transform_9, window_bounds = array<i64: 256, 28>}]} {
    %c0 = arith.constant 0 : index
    %c0_0 = arith.constant 0 : index
    %0 = vector.load %arg1[%c0, %c0_0] : memref<256x64xbf16, #tpu.memory_space<vmem>>, vector<256x64xbf16>
    %c0_1 = arith.constant 0 : index
    %c0_2 = arith.constant 0 : index
    %1 = vector.load %arg2[%c0_1, %c0_2] : memref<64x512xbf16, #tpu.memory_space<vmem>>, vector<64x512xbf16>
    %cst = arith.constant dense<0.000000e+00> : vector<256x512xf32>
    %2 = tpu.matmul %0, %1, %cst {dimension_numbers = #tpu.dot_dimension_numbers<[1], [0], [0], [1], [0, 0, 1, 1], [], []>} : vector<256x64xbf16>, vector<64x512xbf16>, vector<256x512xf32> -> vector<256x512xf32>
    %c0_3 = arith.constant 0 : index
    %c0_4 = arith.constant 0 : index
    %3 = vector.load %arg3[%c0_3, %c0_4] : memref<1x512xf32, #tpu.memory_space<vmem>>, vector<1x512xf32>
    %4 = vector.broadcast %3 : vector<1x512xf32> to vector<256x512xf32>
    %5 = arith.addf %2, %4 : vector<256x512xf32>
    %cst_5 = arith.constant 0.000000e+00 : f32
    %6 = vector.broadcast %cst_5 : f32 to vector<256x512xf32>
    %7 = arith.maximumf %5, %6 : vector<256x512xf32>
    %8 = arith.truncf %7 : vector<256x512xf32> to vector<256x512xbf16>
    %c0_6 = arith.constant 0 : index
    %c0_7 = arith.constant 0 : index
    %9 = vector.load %arg4[%c0_6, %c0_7] : memref<512x256xbf16, #tpu.memory_space<vmem>>, vector<512x256xbf16>
    %cst_8 = arith.constant dense<0.000000e+00> : vector<256x256xf32>
    %10 = tpu.matmul %8, %9, %cst_8 {dimension_numbers = #tpu.dot_dimension_numbers<[1], [0], [0], [1], [0, 0, 1, 1], [], []>} : vector<256x512xbf16>, vector<512x256xbf16>, vector<256x256xf32> -> vector<256x256xf32>
    %c0_9 = arith.constant 0 : index
    %c0_10 = arith.constant 0 : index
    %11 = vector.load %arg5[%c0_9, %c0_10] : memref<1x256xf32, #tpu.memory_space<vmem>>, vector<1x256xf32>
    %12 = vector.broadcast %11 : vector<1x256xf32> to vector<256x256xf32>
    %13 = arith.addf %10, %12 : vector<256x256xf32>
    %cst_11 = arith.constant 0.000000e+00 : f32
    %14 = vector.broadcast %cst_11 : f32 to vector<256x256xf32>
    %15 = arith.maximumf %13, %14 : vector<256x256xf32>
    %16 = arith.truncf %15 : vector<256x256xf32> to vector<256x256xbf16>
    %c0_12 = arith.constant 0 : index
    %c0_13 = arith.constant 0 : index
    %17 = vector.load %arg6[%c0_12, %c0_13] : memref<256x128xbf16, #tpu.memory_space<vmem>>, vector<256x128xbf16>
    %cst_14 = arith.constant dense<0.000000e+00> : vector<256x128xf32>
    %18 = tpu.matmul %16, %17, %cst_14 {dimension_numbers = #tpu.dot_dimension_numbers<[1], [0], [0], [1], [0, 0, 1, 1], [], []>} : vector<256x256xbf16>, vector<256x128xbf16>, vector<256x128xf32> -> vector<256x128xf32>
    %c0_15 = arith.constant 0 : index
    %c0_16 = arith.constant 0 : index
    %19 = vector.load %arg7[%c0_15, %c0_16] : memref<1x128xf32, #tpu.memory_space<vmem>>, vector<1x128xf32>
    %20 = vector.broadcast %19 : vector<1x128xf32> to vector<256x128xf32>
    %21 = arith.addf %18, %20 : vector<256x128xf32>
    %cst_17 = arith.constant 0.000000e+00 : f32
    %22 = vector.broadcast %cst_17 : f32 to vector<256x128xf32>
    %23 = arith.maximumf %21, %22 : vector<256x128xf32>
    %24 = arith.truncf %23 : vector<256x128xf32> to vector<256x128xbf16>
    %c0_18 = arith.constant 0 : index
    %c0_19 = arith.constant 0 : index
    %25 = vector.load %arg8[%c0_18, %c0_19] : memref<128x28xbf16, #tpu.memory_space<vmem>>, vector<128x28xbf16>
    %cst_20 = arith.constant dense<0.000000e+00> : vector<256x28xf32>
    %26 = tpu.matmul %24, %25, %cst_20 {dimension_numbers = #tpu.dot_dimension_numbers<[1], [0], [0], [1], [0, 0, 1, 1], [], []>} : vector<256x128xbf16>, vector<128x28xbf16>, vector<256x28xf32> -> vector<256x28xf32>
    %c0_21 = arith.constant 0 : index
    %c0_22 = arith.constant 0 : index
    %27 = vector.load %arg9[%c0_21, %c0_22] : memref<1x28xf32, #tpu.memory_space<vmem>>, vector<1x28xf32>
    %28 = vector.broadcast %27 : vector<1x28xf32> to vector<256x28xf32>
    %29 = arith.addf %26, %28 : vector<256x28xf32>
    %cst_23 = arith.constant dense<0xFF800000> : vector<256xf32>
    %30 = vector.multi_reduction <maximumf>, %29, %cst_23 [1] : vector<256x28xf32> to vector<256xf32>
    %31 = vector.shape_cast %30 : vector<256xf32> to vector<256x1xf32>
    %32 = vector.broadcast %31 : vector<256x1xf32> to vector<256x28xf32>
    %33 = arith.subf %29, %32 : vector<256x28xf32>
    %34 = math.exp %33 : vector<256x28xf32>
    %cst_24 = arith.constant dense<0.000000e+00> : vector<256xf32>
    %35 = vector.multi_reduction <add>, %34, %cst_24 [1] : vector<256x28xf32> to vector<256xf32>
    %36 = vector.shape_cast %35 : vector<256xf32> to vector<256x1xf32>
    %37 = tpu.reciprocal %36 {approx = true} : vector<256x1xf32> -> vector<256x1xf32>
    %38 = vector.broadcast %37 : vector<256x1xf32> to vector<256x28xf32>
    %39 = arith.mulf %34, %38 : vector<256x28xf32>
    %c0_25 = arith.constant 0 : index
    %c0_26 = arith.constant 0 : index
    %40 = vector.load %arg10[%c0_25, %c0_26] : memref<256x28xf32, #tpu.memory_space<vmem>>, vector<256x28xf32>
    tpu.vector_store %arg10[%c0_25, %c0_26], %39 {strides = array<i32>} : memref<256x28xf32, #tpu.memory_space<vmem>>, vector<256x28xf32>,
    return
  }
  func.func @transform_0(%arg0: i32) -> (i32, i32) {
    %c0_i32 = arith.constant 0 : i32
    %c0_i32_0 = arith.constant 0 : i32
    return %arg0, %c0_i32 : i32, i32
  }
  func.func @transform_1(%arg0: i32) -> (i32, i32) {
    %c0_i32 = arith.constant 0 : i32
    %c0_i32_0 = arith.constant 0 : i32
    %c0_i32_1 = arith.constant 0 : i32
    return %c0_i32, %c0_i32_0 : i32, i32
  }
  func.func @transform_2(%arg0: i32) -> (i32, i32) {
    %c0_i32 = arith.constant 0 : i32
    %c0_i32_0 = arith.constant 0 : i32
    %c0_i32_1 = arith.constant 0 : i32
    return %c0_i32, %c0_i32_0 : i32, i32
  }
  func.func @transform_3(%arg0: i32) -> (i32, i32) {
    %c0_i32 = arith.constant 0 : i32
    %c0_i32_0 = arith.constant 0 : i32
    %c0_i32_1 = arith.constant 0 : i32
    return %c0_i32, %c0_i32_0 : i32, i32
  }
  func.func @transform_4(%arg0: i32) -> (i32, i32) {
    %c0_i32 = arith.constant 0 : i32
    %c0_i32_0 = arith.constant 0 : i32
    %c0_i32_1 = arith.constant 0 : i32
    return %c0_i32, %c0_i32_0 : i32, i32
  }
  func.func @transform_5(%arg0: i32) -> (i32, i32) {
    %c0_i32 = arith.constant 0 : i32
    %c0_i32_0 = arith.constant 0 : i32
    %c0_i32_1 = arith.constant 0 : i32
    return %c0_i32, %c0_i32_0 : i32, i32
  }
  func.func @transform_6(%arg0: i32) -> (i32, i32) {
    %c0_i32 = arith.constant 0 : i32
    %c0_i32_0 = arith.constant 0 : i32
    %c0_i32_1 = arith.constant 0 : i32
    return %c0_i32, %c0_i32_0 : i32, i32
  }
  func.func @transform_7(%arg0: i32) -> (i32, i32) {
    %c0_i32 = arith.constant 0 : i32
    %c0_i32_0 = arith.constant 0 : i32
    %c0_i32_1 = arith.constant 0 : i32
    return %c0_i32, %c0_i32_0 : i32, i32
  }
  func.func @transform_8(%arg0: i32) -> (i32, i32) {
    %c0_i32 = arith.constant 0 : i32
    %c0_i32_0 = arith.constant 0 : i32
    %c0_i32_1 = arith.constant 0 : i32
    return %c0_i32, %c0_i32_0 : i32, i32
  }
  func.func @transform_9(%arg0: i32) -> (i32, i32) {
    %c0_i32 = arith.constant 0 : i32
    %c0_i32_0 = arith.constant 0 : i32
    return %arg0, %c0_i32 : i32, i32
  }
}

</mosaic_0001>

<llo_original>
// kernel: tpu_custom_call.1
$region0: #{tpu_custom_call.1}
  #allocation0 [shape = 'u32[]', space=smem, size = 0x4, offset = 0x4, fixed_abs, tag = 'smem constant byte address 0x4 - core index']
  #allocation1 [shape = 'u32[144,128]{1,0:T(1,128)}', space=vmem, size = 0x12000, scoped, tag = 'internal scratch']
  %s0 = inlined_call_operand.vmem [shape: bf16[256,64], index: 0, kind: input, shape index: {}]
  %s1 = inlined_call_operand.vmem [shape: bf16[64,512], index: 1, kind: input, shape index: {}]
  %s2 = inlined_call_operand.vmem [shape: f32[1,512], index: 2, kind: input, shape index: {}]
  %s3 = inlined_call_operand.hbm [shape: bf16[512,256], index: 3, kind: input, shape index: {}]
  %s4 = inlined_call_operand.vmem [shape: f32[1,256], index: 4, kind: input, shape index: {}]
  %s5 = inlined_call_operand.vmem [shape: bf16[256,128], index: 5, kind: input, shape index: {}]
  %s6 = inlined_call_operand.vmem [shape: f32[1,128], index: 6, kind: input, shape index: {}]
  %s7 = inlined_call_operand.vmem [shape: bf16[128,28], index: 7, kind: input, shape index: {}]
  %s8 = inlined_call_operand.vmem [shape: f32[1,28], index: 8, kind: input, shape index: {}]
  %s9 = inlined_call_operand.vmem [shape: f32[256,28], index: 9, kind: output, shape index: {}]
  %s10 = sld [smem:[#allocation0]]
  $region50: #{tpu_custom_call.1} parent=0
    _
  %s12 = ssub.s32 1, %s10
  %s13 = scalar_select 0, %s12, %s10
  $region1: #{tpu_custom_call.1} parent=0
    #allocation2 [shape = 'u8[262144]{0}', space=vmem, size = 0x40000, scoped, tag = 'input window, operand 3, single buffered']
    #allocation3 [shape = 's32[1]{0}', space=sflag, size = 0x4, scoped, tag = 'scoped memory for tpu_custom_call.1']
    %14 = vsyncpa [#allocation3], 0
    // Predicated region
    $region2: #{tpu_custom_call.1} parent=1 // pred_check
      _
    $region3: #{tpu_custom_call.1} parent=1 // pred_check_branch
      %16 = sbr.rel (0) target = $region5
    $region4: #{tpu_custom_call.1} parent=1 // pred_region
      _
    $region5: #{tpu_custom_call.1} parent=1 // pred_fallthru
      _
    // Predicated region
    $region6: #{tpu_custom_call.1} parent=1 // pred_check
      _
    $region7: #{tpu_custom_call.1} parent=1 // pred_check_branch
      %18 = sbr.rel (0) target = $region9
    $region8: #{tpu_custom_call.1} parent=1 // pred_region
      _
    $region9: #{tpu_custom_call.1} parent=1 // pred_fallthru
      _
    // Predicated region
    $region10: #{tpu_custom_call.1} parent=1 // pred_check
      _
    $region11: #{tpu_custom_call.1} parent=1 // pred_check_branch
      %20 = sbr.rel (0) target = $region13
    $region12: #{tpu_custom_call.1} parent=1 // pred_region
      _
    $region13: #{tpu_custom_call.1} parent=1 // pred_fallthru
      _
    // Predicated region
    $region14: #{tpu_custom_call.1} parent=1 // pred_check
      _
    $region15: #{tpu_custom_call.1} parent=1 // pred_check_branch
      %22 = sbr.rel (0) target = $region17
    $region16: #{tpu_custom_call.1} parent=1 // pred_region
      %s24 = ssub.s32 8192, 8192
      %25 = vsyncadd [#allocation3], %s24
      %s26 = sshll.u32 [#allocation2], 4
      %s27 = int_to_ptr.vmem [resolvable:$true] %s26
      %32 = dma.hbm_to_vmem [thread:$0]  %s3, 8192, %s27, [#allocation3], 128, 128, 8
    $region17: #{tpu_custom_call.1} parent=1 // pred_fallthru
      _
    // Predicated region
    $region18: #{tpu_custom_call.1} parent=1 // pred_check
      _
    $region19: #{tpu_custom_call.1} parent=1 // pred_check_branch
      %34 = sbr.rel (0) target = $region21
    $region20: #{tpu_custom_call.1} parent=1 // pred_region
      _
    $region21: #{tpu_custom_call.1} parent=1 // pred_fallthru
      _
    // Predicated region
    $region22: #{tpu_custom_call.1} parent=1 // pred_check
      _
    $region23: #{tpu_custom_call.1} parent=1 // pred_check_branch
      %36 = sbr.rel (0) target = $region25
    $region24: #{tpu_custom_call.1} parent=1 // pred_region
      _
    $region25: #{tpu_custom_call.1} parent=1 // pred_fallthru
      _
    // Predicated region
    $region26: #{tpu_custom_call.1} parent=1 // pred_check
      _
    $region27: #{tpu_custom_call.1} parent=1 // pred_check_branch
      %38 = sbr.rel (0) target = $region29
    $region28: #{tpu_custom_call.1} parent=1 // pred_region
      _
    $region29: #{tpu_custom_call.1} parent=1 // pred_fallthru
      _
    // Predicated region
    $region30: #{tpu_custom_call.1} parent=1 // pred_check
      _
    $region31: #{tpu_custom_call.1} parent=1 // pred_check_branch
      %40 = sbr.rel (0) target = $region33
    $region32: #{tpu_custom_call.1} parent=1 // pred_region
      _
    $region33: #{tpu_custom_call.1} parent=1 // pred_fallthru
      _
    // Predicated region
    $region34: #{tpu_custom_call.1} parent=1 // pred_check
      _
    $region35: #{tpu_custom_call.1} parent=1 // pred_check_branch
      %42 = sbr.rel (0) target = $region37
    $region36: #{tpu_custom_call.1} parent=1 // pred_region
      _
    $region37: #{tpu_custom_call.1} parent=1 // pred_fallthru
      _
    // Predicated region
    $region38: #{tpu_custom_call.1} parent=1 // pred_check
      _
    $region39: #{tpu_custom_call.1} parent=1 // pred_check_branch
      %44 = sbr.rel (0) target = $region41
    $region40: #{tpu_custom_call.1} parent=1 // pred_region
      %45 = dma.done [#allocation3], 8192
    $region41: #{tpu_custom_call.1} parent=1 // pred_fallthru
      _
    %v47 = vld [vmem:[%s0] sm:$0xf]
    %v48 = vld [vmem:[%s0 + $0x4] sm:$0xf]
    %v49 = vld [vmem:[%s0 + $0x8] sm:$0xf]
    %v50 = vld [vmem:[%s0 + $0xc] sm:$0xf]
    %v51 = vld [vmem:[%s0 + $0x10] sm:$0xf]
    %v52 = vld [vmem:[%s0 + $0x14] sm:$0xf]
    %v53 = vld [vmem:[%s0 + $0x18] sm:$0xf]
    %v54 = vld [vmem:[%s0 + $0x1c] sm:$0xf]
    %v55 = vld [vmem:[%s0 + $0x20] sm:$0xf]
    %v56 = vld [vmem:[%s0 + $0x24] sm:$0xf]
    %v57 = vld [vmem:[%s0 + $0x28] sm:$0xf]
    %v58 = vld [vmem:[%s0 + $0x2c] sm:$0xf]
    %v59 = vld [vmem:[%s0 + $0x30] sm:$0xf]
    %v60 = vld [vmem:[%s0 + $0x34] sm:$0xf]
    %v61 = vld [vmem:[%s0 + $0x38] sm:$0xf]
    %v62 = vld [vmem:[%s0 + $0x3c] sm:$0xf]
    %v63 = vld [vmem:[%s0 + $0x40] sm:$0xf]
    %v64 = vld [vmem:[%s0 + $0x44] sm:$0xf]
    %v65 = vld [vmem:[%s0 + $0x48] sm:$0xf]
    %v66 = vld [vmem:[%s0 + $0x4c] sm:$0xf]
    %v67 = vld [vmem:[%s0 + $0x50] sm:$0xf]
    %v68 = vld [vmem:[%s0 + $0x54] sm:$0xf]
    %v69 = vld [vmem:[%s0 + $0x58] sm:$0xf]
    %v70 = vld [vmem:[%s0 + $0x5c] sm:$0xf]
    %v71 = vld [vmem:[%s0 + $0x60] sm:$0xf]
    %v72 = vld [vmem:[%s0 + $0x64] sm:$0xf]
    %v73 = vld [vmem:[%s0 + $0x68] sm:$0xf]
    %v74 = vld [vmem:[%s0 + $0x6c] sm:$0xf]
    %v75 = vld [vmem:[%s0 + $0x70] sm:$0xf]
    %v76 = vld [vmem:[%s0 + $0x74] sm:$0xf]
    %v77 = vld [vmem:[%s0 + $0x78] sm:$0xf]
    %v78 = vld [vmem:[%s0 + $0x7c] sm:$0xf]
    %v79 = vld [vmem:[%s1] sm:$0xff]
    %v80 = vld [vmem:[%s1 + $0x8] sm:$0xff]
    %v81 = vld [vmem:[%s1 + $0x10] sm:$0xff]
    %v82 = vld [vmem:[%s1 + $0x18] sm:$0xff]
    %v83 = vld [vmem:[%s1 + $0x20] sm:$0xff]
    %v84 = vld [vmem:[%s1 + $0x28] sm:$0xff]
    %v85 = vld [vmem:[%s1 + $0x30] sm:$0xff]
    %v86 = vld [vmem:[%s1 + $0x38] sm:$0xff]
    %v87 = vld [vmem:[%s1 + $0x40] sm:$0xff]
    %v88 = vld [vmem:[%s1 + $0x48] sm:$0xff]
    %v89 = vld [vmem:[%s1 + $0x50] sm:$0xff]
    %v90 = vld [vmem:[%s1 + $0x58] sm:$0xff]
    %v91 = vld [vmem:[%s1 + $0x60] sm:$0xff]
    %v92 = vld [vmem:[%s1 + $0x68] sm:$0xff]
    %v93 = vld [vmem:[%s1 + $0x70] sm:$0xff]
    %v94 = vld [vmem:[%s1 + $0x78] sm:$0xff]
    %v95 = vld [vmem:[%s2] sm:$0xf]
    %v97 = vlaneseq
    %v98 = vshrl.u32 %v97, 7
    %v99 = vsub.s32 0, %v98
    %v100 = vrot.slane %v95, %v99
    %v101 = vlaneseq
    %v102 = vshrl.u32 %v101, 7
    %v103 = vsub.s32 1, %v102
    %v104 = vrot.slane %v95, %v103
    %v105 = vlaneseq
    %v106 = vshrl.u32 %v105, 7
    %v107 = vsub.s32 2, %v106
    %v108 = vrot.slane %v95, %v107
    %v109 = vlaneseq
    %v110 = vshrl.u32 %v109, 7
    %v111 = vsub.s32 3, %v110
    %v112 = vrot.slane %v95, %v111
    %v149 = vunpack.c.l.b16 %v47
    %v150 = vunpack.c.l.b16 %v48
    %v151 = vunpack.c.l.b16 %v49
    %v152 = vunpack.c.l.b16 %v50
    %v153 = vunpack.c.l.b16 %v51
    %v154 = vunpack.c.l.b16 %v52
    %v155 = vunpack.c.l.b16 %v53
    %v156 = vunpack.c.l.b16 %v54
    %v157 = vunpack.c.l.b16 %v55
    %v158 = vunpack.c.l.b16 %v56
    %v159 = vunpack.c.l.b16 %v57
    %v160 = vunpack.c.l.b16 %v58
    %v161 = vunpack.c.l.b16 %v59
    %v162 = vunpack.c.l.b16 %v60
    %v163 = vunpack.c.l.b16 %v61
    %v164 = vunpack.c.l.b16 %v62
    %v165 = vunpack.c.l.b16 %v63
    %v166 = vunpack.c.l.b16 %v64
    %v167 = vunpack.c.l.b16 %v65
    %v168 = vunpack.c.l.b16 %v66
    %v169 = vunpack.c.l.b16 %v67
    %v170 = vunpack.c.l.b16 %v68
    %v171 = vunpack.c.l.b16 %v69
    %v172 = vunpack.c.l.b16 %v70
    %v173 = vunpack.c.l.b16 %v71
    %v174 = vunpack.c.l.b16 %v72
    %v175 = vunpack.c.l.b16 %v73
    %v176 = vunpack.c.l.b16 %v74
    %v177 = vunpack.c.l.b16 %v75
    %v178 = vunpack.c.l.b16 %v76
    %v179 = vunpack.c.l.b16 %v77
    %v180 = vunpack.c.l.b16 %v78
    %v181 = vpack.c.b16 %v150, %v149
    %v182 = vpack.c.b16 %v152, %v151
    %v183 = vpack.c.b16 %v154, %v153
    %v184 = vpack.c.b16 %v156, %v155
    %v185 = vpack.c.b16 %v158, %v157
    %v186 = vpack.c.b16 %v160, %v159
    %v187 = vpack.c.b16 %v162, %v161
    %v188 = vpack.c.b16 %v164, %v163
    %v189 = vpack.c.b16 %v166, %v165
    %v190 = vpack.c.b16 %v168, %v167
    %v191 = vpack.c.b16 %v170, %v169
    %v192 = vpack.c.b16 %v172, %v171
    %v193 = vpack.c.b16 %v174, %v173
    %v194 = vpack.c.b16 %v176, %v175
    %v195 = vpack.c.b16 %v178, %v177
    %v196 = vpack.c.b16 %v180, %v179
    %v213 = vunpack.c.l.b16 %v79
    %v214 = vunpack.c.h.b16 %v79
    %v215 = vunpack.c.l.b16 %v80
    %v216 = vunpack.c.h.b16 %v80
    %v217 = vunpack.c.l.b16 %v81
    %v218 = vunpack.c.h.b16 %v81
    %v219 = vunpack.c.l.b16 %v82
    %v220 = vunpack.c.h.b16 %v82
    %v221 = vunpack.c.l.b16 %v83
    %v222 = vunpack.c.h.b16 %v83
    %v223 = vunpack.c.l.b16 %v84
    %v224 = vunpack.c.h.b16 %v84
    %v225 = vunpack.c.l.b16 %v85
    %v226 = vunpack.c.h.b16 %v85
    %v227 = vunpack.c.l.b16 %v86
    %v228 = vunpack.c.h.b16 %v86
    %v229 = vunpack.c.l.b16 %v87
    %v230 = vunpack.c.h.b16 %v87
    %v231 = vunpack.c.l.b16 %v88
    %v232 = vunpack.c.h.b16 %v88
    %v233 = vunpack.c.l.b16 %v89
    %v234 = vunpack.c.h.b16 %v89
    %v235 = vunpack.c.l.b16 %v90
    %v236 = vunpack.c.h.b16 %v90
    %v237 = vunpack.c.l.b16 %v91
    %v238 = vunpack.c.h.b16 %v91
    %v239 = vunpack.c.l.b16 %v92
    %v240 = vunpack.c.h.b16 %v92
    %v241 = vunpack.c.l.b16 %v93
    %v242 = vunpack.c.h.b16 %v93
    %v243 = vunpack.c.l.b16 %v94
    %v244 = vunpack.c.h.b16 %v94
    %v245 = vpack.c.b16 %v217, %v213
    %v246 = vpack.c.b16 %v218, %v214
    %v247 = vpack.c.b16 %v219, %v215
    %v248 = vpack.c.b16 %v220, %v216
    %v249 = vpack.c.b16 %v225, %v221
    %v250 = vpack.c.b16 %v226, %v222
    %v251 = vpack.c.b16 %v227, %v223
    %v252 = vpack.c.b16 %v228, %v224
    %v253 = vpack.c.b16 %v233, %v229
    %v254 = vpack.c.b16 %v234, %v230
    %v255 = vpack.c.b16 %v235, %v231
    %v256 = vpack.c.b16 %v236, %v232
    %v257 = vpack.c.b16 %v241, %v237
    %v258 = vpack.c.b16 %v242, %v238
    %v259 = vpack.c.b16 %v243, %v239
    %v260 = vpack.c.b16 %v244, %v240
    %vm277 = vcmask 523264
    %v279 = vsel %vm277, %v181, 0
    %v282 = vsel %vm277, %v182, 0
    %v285 = vsel %vm277, %v183, 0
    %v288 = vsel %vm277, %v184, 0
    %v291 = vsel %vm277, %v185, 0
    %v294 = vsel %vm277, %v186, 0
    %v297 = vsel %vm277, %v187, 0
    %v300 = vsel %vm277, %v188, 0
    %v303 = vsel %vm277, %v189, 0
    %v306 = vsel %vm277, %v190, 0
    %v309 = vsel %vm277, %v191, 0
    %v312 = vsel %vm277, %v192, 0
    %v315 = vsel %vm277, %v193, 0
    %v318 = vsel %vm277, %v194, 0
    %v321 = vsel %vm277, %v195, 0
    %v324 = vsel %vm277, %v196, 0
    %326 = vmatprep.subr.bf16.mxu0 %v246
    %327 = vmatpush1.bf16.msra.mxu0 %v245
    %328 = vmatprep.subr.bf16.mxu0 %v250
    %329 = vmatpush1.bf16.msra.mxu0 %v249
    %330 = vmatprep.subr.bf16.mxu0 %v254
    %331 = vmatpush1.bf16.msra.mxu0 %v253
    %332 = vmatprep.subr.bf16.mxu0 %v258
    %333 = vmatpush1.bf16.msra.mxu0 %v257
    %334 = vmatprep.subr.bf16.mxu0 0
    %335 = vmatpush1.bf16.msra.mxu0 0
    %336 = vmatprep.subr.bf16.mxu0 0
    %337 = vmatpush1.bf16.msra.mxu0 0
    %338 = vmatprep.subr.bf16.mxu0 0
    %339 = vmatpush1.bf16.msra.mxu0 0
    %340 = vmatprep.subr.bf16.mxu0 0
    %341 = vmatpush1.bf16.msra.mxu0 0
    %342 = vmatprep.subr.bf16.mxu0 0
    %343 = vmatpush1.bf16.msra.mxu0 0
    %344 = vmatprep.subr.bf16.mxu0 0
    %345 = vmatpush1.bf16.msra.mxu0 0
    %346 = vmatprep.subr.bf16.mxu0 0
    %347 = vmatpush1.bf16.msra.mxu0 0
    %348 = vmatprep.subr.bf16.mxu0 0
    %349 = vmatpush1.bf16.msra.mxu0 0
    %350 = vmatprep.subr.bf16.mxu0 0
    %351 = vmatpush1.bf16.msra.mxu0 0
    %352 = vmatprep.subr.bf16.mxu0 0
    %353 = vmatpush1.bf16.msra.mxu0 0
    %354 = vmatprep.subr.bf16.mxu0 0
    %355 = vmatpush1.bf16.msra.mxu0 0
    %356 = vmatprep.subr.bf16.mxu0 0
    %357 = vmatpush1.bf16.msra.mxu0 0
    %358 = vmatprep.mubr.bf16.mxu0 0
    %359 = vmatmul.mubr.bf16.gmra.mrb[0].mxu0 %v279
    %v360 = vpop.f32.mrb[0].mxu0
    %v361 = vadd.f32 %v100, %v360
    %v362 = vpop.f32.mrb[0].mxu0
    %v363 = vadd.f32 %v104, %v362
    %v364 = vpop.f32.mrb[0].mxu0
    %v365 = vadd.f32 %v100, %v364
    %v366 = vpop.f32.mrb[0].mxu0
    %v367 = vadd.f32 %v104, %v366
    %368 = vmatprep.mubr.bf16.mxu0 0
    %369 = vmatmul.mubr.bf16.gmra.mrb[0].mxu0 %v282
    %v370 = vpop.f32.mrb[0].mxu0
    %v371 = vadd.f32 %v100, %v370
    %v372 = vpop.f32.mrb[0].mxu0
    %v373 = vadd.f32 %v104, %v372
    %v374 = vpop.f32.mrb[0].mxu0
    %v375 = vadd.f32 %v100, %v374
    %v376 = vpop.f32.mrb[0].mxu0
    %v377 = vadd.f32 %v104, %v376
    %378 = vmatprep.mubr.bf16.mxu0 0
    %379 = vmatmul.mubr.bf16.gmra.mrb[0].mxu0 %v285
    %v380 = vpop.f32.mrb[0].mxu0
    %v381 = vadd.f32 %v100, %v380
    %v382 = vpop.f32.mrb[0].mxu0
    %v383 = vadd.f32 %v104, %v382
    %v384 = vpop.f32.mrb[0].mxu0
    %v385 = vadd.f32 %v100, %v384
    %v386 = vpop.f32.mrb[0].mxu0
    %v387 = vadd.f32 %v104, %v386
    %388 = vmatprep.mubr.bf16.mxu0 0
    %389 = vmatmul.mubr.bf16.gmra.mrb[0].mxu0 %v288
    %v390 = vpop.f32.mrb[0].mxu0
    %v391 = vadd.f32 %v100, %v390
    %v392 = vpop.f32.mrb[0].mxu0
    %v393 = vadd.f32 %v104, %v392
    %v394 = vpop.f32.mrb[0].mxu0
    %v395 = vadd.f32 %v100, %v394
    %v396 = vpop.f32.mrb[0].mxu0
    %v397 = vadd.f32 %v104, %v396
    %398 = vmatprep.mubr.bf16.mxu0 0
    %399 = vmatmul.mubr.bf16.gmra.mrb[0].mxu0 %v291
    %v400 = vpop.f32.mrb[0].mxu0
    %v401 = vadd.f32 %v100, %v400
    %v402 = vpop.f32.mrb[0].mxu0
    %v403 = vadd.f32 %v104, %v402
    %v404 = vpop.f32.mrb[0].mxu0
    %v405 = vadd.f32 %v100, %v404
    %v406 = vpop.f32.mrb[0].mxu0
    %v407 = vadd.f32 %v104, %v406
    %408 = vmatprep.mubr.bf16.mxu0 0
    %409 = vmatmul.mubr.bf16.gmra.mrb[0].mxu0 %v294
    %v410 = vpop.f32.mrb[0].mxu0
    %v411 = vadd.f32 %v100, %v410
    %v412 = vpop.f32.mrb[0].mxu0
    %v413 = vadd.f32 %v104, %v412
    %v414 = vpop.f32.mrb[0].mxu0
    %v415 = vadd.f32 %v100, %v414
    %v416 = vpop.f32.mrb[0].mxu0
    %v417 = vadd.f32 %v104, %v416
    %418 = vmatprep.mubr.bf16.mxu0 0
    %419 = vmatmul.mubr.bf16.gmra.mrb[0].mxu0 %v297
    %v420 = vpop.f32.mrb[0].mxu0
    %v421 = vadd.f32 %v100, %v420
    %v422 = vpop.f32.mrb[0].mxu0
    %v423 = vadd.f32 %v104, %v422
    %v424 = vpop.f32.mrb[0].mxu0
    %v425 = vadd.f32 %v100, %v424
    %v426 = vpop.f32.mrb[0].mxu0
    %v427 = vadd.f32 %v104, %v426
    %428 = vmatprep.mubr.bf16.mxu0 0
    %429 = vmatmul.mubr.bf16.gmra.mrb[0].mxu0 %v300
    %v430 = vpop.f32.mrb[0].mxu0
    %v431 = vadd.f32 %v100, %v430
    %v432 = vpop.f32.mrb[0].mxu0
    %v433 = vadd.f32 %v104, %v432
    %v434 = vpop.f32.mrb[0].mxu0
    %v435 = vadd.f32 %v100, %v434
    %v436 = vpop.f32.mrb[0].mxu0
    %v437 = vadd.f32 %v104, %v436
    %438 = vmatprep.mubr.bf16.mxu0 0
    %439 = vmatmul.mubr.bf16.gmra.mrb[0].mxu0 %v303
    %v440 = vpop.f32.mrb[0].mxu0
    %v441 = vadd.f32 %v100, %v440
    %v442 = vpop.f32.mrb[0].mxu0
    %v443 = vadd.f32 %v104, %v442
    %v444 = vpop.f32.mrb[0].mxu0
    %v445 = vadd.f32 %v100, %v444
    %v446 = vpop.f32.mrb[0].mxu0
    %v447 = vadd.f32 %v104, %v446
    %448 = vmatprep.mubr.bf16.mxu0 0
    %449 = vmatmul.mubr.bf16.gmra.mrb[0].mxu0 %v306
    %v450 = vpop.f32.mrb[0].mxu0
    %v451 = vadd.f32 %v100, %v450
    %v452 = vpop.f32.mrb[0].mxu0
    %v453 = vadd.f32 %v104, %v452
    %v454 = vpop.f32.mrb[0].mxu0
    %v455 = vadd.f32 %v100, %v454
    %v456 = vpop.f32.mrb[0].mxu0
    %v457 = vadd.f32 %v104, %v456
    %458 = vmatprep.mubr.bf16.mxu0 0
    %459 = vmatmul.mubr.bf16.gmra.mrb[0].mxu0 %v309
    %v460 = vpop.f32.mrb[0].mxu0
    %v461 = vadd.f32 %v100, %v460
    %v462 = vpop.f32.mrb[0].mxu0
    %v463 = vadd.f32 %v104, %v462
    %v464 = vpop.f32.mrb[0].mxu0
    %v465 = vadd.f32 %v100, %v464
    %v466 = vpop.f32.mrb[0].mxu0
    %v467 = vadd.f32 %v104, %v466
    %468 = vmatprep.mubr.bf16.mxu0 0
    %469 = vmatmul.mubr.bf16.gmra.mrb[0].mxu0 %v312
    %v470 = vpop.f32.mrb[0].mxu0
    %v471 = vadd.f32 %v100, %v470
    %v472 = vpop.f32.mrb[0].mxu0
    %v473 = vadd.f32 %v104, %v472
    %v474 = vpop.f32.mrb[0].mxu0
    %v475 = vadd.f32 %v100, %v474
    %v476 = vpop.f32.mrb[0].mxu0
    %v477 = vadd.f32 %v104, %v476
    %478 = vmatprep.mubr.bf16.mxu0 0
    %479 = vmatmul.mubr.bf16.gmra.mrb[0].mxu0 %v315
    %v480 = vpop.f32.mrb[0].mxu0
    %v481 = vadd.f32 %v100, %v480
    %v482 = vpop.f32.mrb[0].mxu0
    %v483 = vadd.f32 %v104, %v482
    %v484 = vpop.f32.mrb[0].mxu0
    %v485 = vadd.f32 %v100, %v484
    %v486 = vpop.f32.mrb[0].mxu0
    %v487 = vadd.f32 %v104, %v486
    %488 = vmatprep.mubr.bf16.mxu0 0
    %489 = vmatmul.mubr.bf16.gmra.mrb[0].mxu0 %v318
    %v490 = vpop.f32.mrb[0].mxu0
    %v491 = vadd.f32 %v100, %v490
    %v492 = vpop.f32.mrb[0].mxu0
    %v493 = vadd.f32 %v104, %v492
    %v494 = vpop.f32.mrb[0].mxu0
    %v495 = vadd.f32 %v100, %v494
    %v496 = vpop.f32.mrb[0].mxu0
    %v497 = vadd.f32 %v104, %v496
    %498 = vmatprep.mubr.bf16.mxu0 0
    %499 = vmatmul.mubr.bf16.gmra.mrb[0].mxu0 %v321
    %v500 = vpop.f32.mrb[0].mxu0
    %v501 = vadd.f32 %v100, %v500
    %v502 = vpop.f32.mrb[0].mxu0
    %v503 = vadd.f32 %v104, %v502
    %v504 = vpop.f32.mrb[0].mxu0
    %v505 = vadd.f32 %v100, %v504
    %v506 = vpop.f32.mrb[0].mxu0
    %v507 = vadd.f32 %v104, %v506
    %508 = vmatprep.mubr.bf16.mxu0 0
    %509 = vmatmul.mubr.bf16.gmra.mrb[0].mxu0 %v324
    %v510 = vpop.f32.mrb[0].mxu0
    %v511 = vadd.f32 %v100, %v510
    %v512 = vpop.f32.mrb[0].mxu0
    %v513 = vadd.f32 %v104, %v512
    %v514 = vpop.f32.mrb[0].mxu0
    %v515 = vadd.f32 %v100, %v514
    %v516 = vpop.f32.mrb[0].mxu0
    %v517 = vadd.f32 %v104, %v516
    %518 = vdwg.mxu0
    %519 = vmatprep.subr.bf16.mxu0 %v248
    %520 = vmatpush1.bf16.msra.mxu0 %v247
    %521 = vmatprep.subr.bf16.mxu0 %v252
    %522 = vmatpush1.bf16.msra.mxu0 %v251
    %523 = vmatprep.subr.bf16.mxu0 %v256
    %524 = vmatpush1.bf16.msra.mxu0 %v255
    %525 = vmatprep.subr.bf16.mxu0 %v260
    %526 = vmatpush1.bf16.msra.mxu0 %v259
    %527 = vmatprep.subr.bf16.mxu0 0
    %528 = vmatpush1.bf16.msra.mxu0 0
    %529 = vmatprep.subr.bf16.mxu0 0
    %530 = vmatpush1.bf16.msra.mxu0 0
    %531 = vmatprep.subr.bf16.mxu0 0
    %532 = vmatpush1.bf16.msra.mxu0 0
    %533 = vmatprep.subr.bf16.mxu0 0
    %534 = vmatpush1.bf16.msra.mxu0 0
    %535 = vmatprep.subr.bf16.mxu0 0
    %536 = vmatpush1.bf16.msra.mxu0 0
    %537 = vmatprep.subr.bf16.mxu0 0
    %538 = vmatpush1.bf16.msra.mxu0 0
    %539 = vmatprep.subr.bf16.mxu0 0
    %540 = vmatpush1.bf16.msra.mxu0 0
    %541 = vmatprep.subr.bf16.mxu0 0
    %542 = vmatpush1.bf16.msra.mxu0 0
    %543 = vmatprep.subr.bf16.mxu0 0
    %544 = vmatpush1.bf16.msra.mxu0 0
    %545 = vmatprep.subr.bf16.mxu0 0
    %546 = vmatpush1.bf16.msra.mxu0 0
    %547 = vmatprep.subr.bf16.mxu0 0
    %548 = vmatpush1.bf16.msra.mxu0 0
    %549 = vmatprep.subr.bf16.mxu0 0
    %550 = vmatpush1.bf16.msra.mxu0 0
    %551 = vmatprep.mubr.bf16.mxu0 0
    %552 = vmatmul.mubr.bf16.gmra.mrb[0].mxu0 %v279
    %v553 = vpop.f32.mrb[0].mxu0
    %v554 = vadd.f32 %v108, %v553
    %v555 = vpop.f32.mrb[0].mxu0
    %v556 = vadd.f32 %v112, %v555
    %v557 = vpop.f32.mrb[0].mxu0
    %v558 = vadd.f32 %v108, %v557
    %v559 = vpop.f32.mrb[0].mxu0
    %v560 = vadd.f32 %v112, %v559
    %561 = vmatprep.mubr.bf16.mxu0 0
    %562 = vmatmul.mubr.bf16.gmra.mrb[0].mxu0 %v282
    %v563 = vpop.f32.mrb[0].mxu0
    %v564 = vadd.f32 %v108, %v563
    %v565 = vpop.f32.mrb[0].mxu0
    %v566 = vadd.f32 %v112, %v565
    %v567 = vpop.f32.mrb[0].mxu0
    %v568 = vadd.f32 %v108, %v567
    %v569 = vpop.f32.mrb[0].mxu0
    %v570 = vadd.f32 %v112, %v569
    %571 = vmatprep.mubr.bf16.mxu0 0
    %572 = vmatmul.mubr.bf16.gmra.mrb[0].mxu0 %v285
    %v573 = vpop.f32.mrb[0].mxu0
    %v574 = vadd.f32 %v108, %v573
    %v575 = vpop.f32.mrb[0].mxu0
    %v576 = vadd.f32 %v112, %v575
    %v577 = vpop.f32.mrb[0].mxu0
    %v578 = vadd.f32 %v108, %v577
    %v579 = vpop.f32.mrb[0].mxu0
    %v580 = vadd.f32 %v112, %v579
    %581 = vmatprep.mubr.bf16.mxu0 0
    %582 = vmatmul.mubr.bf16.gmra.mrb[0].mxu0 %v288
    %v583 = vpop.f32.mrb[0].mxu0
    %v584 = vadd.f32 %v108, %v583
    %v585 = vpop.f32.mrb[0].mxu0
    %v586 = vadd.f32 %v112, %v585
    %v587 = vpop.f32.mrb[0].mxu0
    %v588 = vadd.f32 %v108, %v587
    %v589 = vpop.f32.mrb[0].mxu0
    %v590 = vadd.f32 %v112, %v589
    %591 = vmatprep.mubr.bf16.mxu0 0
    %592 = vmatmul.mubr.bf16.gmra.mrb[0].mxu0 %v291
    %v593 = vpop.f32.mrb[0].mxu0
    %v594 = vadd.f32 %v108, %v593
    %v595 = vpop.f32.mrb[0].mxu0
    %v596 = vadd.f32 %v112, %v595
    %v597 = vpop.f32.mrb[0].mxu0
    %v598 = vadd.f32 %v108, %v597
    %v599 = vpop.f32.mrb[0].mxu0
    %v600 = vadd.f32 %v112, %v599
    %601 = vmatprep.mubr.bf16.mxu0 0
    %602 = vmatmul.mubr.bf16.gmra.mrb[0].mxu0 %v294
    %v603 = vpop.f32.mrb[0].mxu0
    %v604 = vadd.f32 %v108, %v603
    %v605 = vpop.f32.mrb[0].mxu0
    %v606 = vadd.f32 %v112, %v605
    %v607 = vpop.f32.mrb[0].mxu0
    %v608 = vadd.f32 %v108, %v607
    %v609 = vpop.f32.mrb[0].mxu0
    %v610 = vadd.f32 %v112, %v609
    %611 = vmatprep.mubr.bf16.mxu0 0
    %612 = vmatmul.mubr.bf16.gmra.mrb[0].mxu0 %v297
    %v613 = vpop.f32.mrb[0].mxu0
    %v614 = vadd.f32 %v108, %v613
    %v615 = vpop.f32.mrb[0].mxu0
    %v616 = vadd.f32 %v112, %v615
    %v617 = vpop.f32.mrb[0].mxu0
    %v618 = vadd.f32 %v108, %v617
    %v619 = vpop.f32.mrb[0].mxu0
    %v620 = vadd.f32 %v112, %v619
    %621 = vmatprep.mubr.bf16.mxu0 0
    %622 = vmatmul.mubr.bf16.gmra.mrb[0].mxu0 %v300
    %v623 = vpop.f32.mrb[0].mxu0
    %v624 = vadd.f32 %v108, %v623
    %v625 = vpop.f32.mrb[0].mxu0
    %v626 = vadd.f32 %v112, %v625
    %v627 = vpop.f32.mrb[0].mxu0
    %v628 = vadd.f32 %v108, %v627
    %v629 = vpop.f32.mrb[0].mxu0
    %v630 = vadd.f32 %v112, %v629
    %631 = vmatprep.mubr.bf16.mxu0 0
    %632 = vmatmul.mubr.bf16.gmra.mrb[0].mxu0 %v303
    %v633 = vpop.f32.mrb[0].mxu0
    %v634 = vadd.f32 %v108, %v633
    %v635 = vpop.f32.mrb[0].mxu0
    %v636 = vadd.f32 %v112, %v635
    %v637 = vpop.f32.mrb[0].mxu0
    %v638 = vadd.f32 %v108, %v637
    %v639 = vpop.f32.mrb[0].mxu0
    %v640 = vadd.f32 %v112, %v639
    %641 = vmatprep.mubr.bf16.mxu0 0
    %642 = vmatmul.mubr.bf16.gmra.mrb[0].mxu0 %v306
    %v643 = vpop.f32.mrb[0].mxu0
    %v644 = vadd.f32 %v108, %v643
    %v645 = vpop.f32.mrb[0].mxu0
    %v646 = vadd.f32 %v112, %v645
    %v647 = vpop.f32.mrb[0].mxu0
    %v648 = vadd.f32 %v108, %v647
    %v649 = vpop.f32.mrb[0].mxu0
    %v650 = vadd.f32 %v112, %v649
    %651 = vmatprep.mubr.bf16.mxu0 0
    %652 = vmatmul.mubr.bf16.gmra.mrb[0].mxu0 %v309
    %v653 = vpop.f32.mrb[0].mxu0
    %v654 = vadd.f32 %v108, %v653
    %v655 = vpop.f32.mrb[0].mxu0
    %v656 = vadd.f32 %v112, %v655
    %v657 = vpop.f32.mrb[0].mxu0
    %v658 = vadd.f32 %v108, %v657
    %v659 = vpop.f32.mrb[0].mxu0
    %v660 = vadd.f32 %v112, %v659
    %661 = vmatprep.mubr.bf16.mxu0 0
    %662 = vmatmul.mubr.bf16.gmra.mrb[0].mxu0 %v312
    %v663 = vpop.f32.mrb[0].mxu0
    %v664 = vadd.f32 %v108, %v663
    %v665 = vpop.f32.mrb[0].mxu0
    %v666 = vadd.f32 %v112, %v665
    %v667 = vpop.f32.mrb[0].mxu0
    %v668 = vadd.f32 %v108, %v667
    %v669 = vpop.f32.mrb[0].mxu0
    %v670 = vadd.f32 %v112, %v669
    %671 = vmatprep.mubr.bf16.mxu0 0
    %672 = vmatmul.mubr.bf16.gmra.mrb[0].mxu0 %v315
    %v673 = vpop.f32.mrb[0].mxu0
    %v674 = vadd.f32 %v108, %v673
    %v675 = vpop.f32.mrb[0].mxu0
    %v676 = vadd.f32 %v112, %v675
    %v677 = vpop.f32.mrb[0].mxu0
    %v678 = vadd.f32 %v108, %v677
    %v679 = vpop.f32.mrb[0].mxu0
    %v680 = vadd.f32 %v112, %v679
    %681 = vmatprep.mubr.bf16.mxu0 0
    %682 = vmatmul.mubr.bf16.gmra.mrb[0].mxu0 %v318
    %v683 = vpop.f32.mrb[0].mxu0
    %v684 = vadd.f32 %v108, %v683
    %v685 = vpop.f32.mrb[0].mxu0
    %v686 = vadd.f32 %v112, %v685
    %v687 = vpop.f32.mrb[0].mxu0
    %v688 = vadd.f32 %v108, %v687
    %v689 = vpop.f32.mrb[0].mxu0
    %v690 = vadd.f32 %v112, %v689
    %691 = vmatprep.mubr.bf16.mxu0 0
    %692 = vmatmul.mubr.bf16.gmra.mrb[0].mxu0 %v321
    %v693 = vpop.f32.mrb[0].mxu0
    %v694 = vadd.f32 %v108, %v693
    %v695 = vpop.f32.mrb[0].mxu0
    %v696 = vadd.f32 %v112, %v695
    %v697 = vpop.f32.mrb[0].mxu0
    %v698 = vadd.f32 %v108, %v697
    %v699 = vpop.f32.mrb[0].mxu0
    %v700 = vadd.f32 %v112, %v699
    %701 = vmatprep.mubr.bf16.mxu0 0
    %702 = vmatmul.mubr.bf16.gmra.mrb[0].mxu0 %v324
    %v703 = vpop.f32.mrb[0].mxu0
    %v704 = vadd.f32 %v108, %v703
    %v705 = vpop.f32.mrb[0].mxu0
    %v706 = vadd.f32 %v112, %v705
    %v707 = vpop.f32.mrb[0].mxu0
    %v708 = vadd.f32 %v108, %v707
    %v709 = vpop.f32.mrb[0].mxu0
    %v710 = vadd.f32 %v112, %v709
    %711 = vdwg.mxu0
    %v712 = vmax.f32 %v361, 0.0
    %v713 = vmax.f32 %v363, 0.0
    %v714 = vmax.f32 %v554, 0.0
    %v715 = vmax.f32 %v556, 0.0
    %v716 = vmax.f32 %v365, 0.0
    %v717 = vmax.f32 %v367, 0.0
    %v718 = vmax.f32 %v558, 0.0
    %v719 = vmax.f32 %v560, 0.0
    %v720 = vmax.f32 %v371, 0.0
    %v721 = vmax.f32 %v373, 0.0
    %v722 = vmax.f32 %v564, 0.0
    %v723 = vmax.f32 %v566, 0.0
    %v724 = vmax.f32 %v375, 0.0
    %v725 = vmax.f32 %v377, 0.0
    %v726 = vmax.f32 %v568, 0.0
    %v727 = vmax.f32 %v570, 0.0
    %v728 = vmax.f32 %v381, 0.0
    %v729 = vmax.f32 %v383, 0.0
    %v730 = vmax.f32 %v574, 0.0
    %v731 = vmax.f32 %v576, 0.0
    %v732 = vmax.f32 %v385, 0.0
    %v733 = vmax.f32 %v387, 0.0
    %v734 = vmax.f32 %v578, 0.0
    %v735 = vmax.f32 %v580, 0.0
    %v736 = vmax.f32 %v391, 0.0
    %v737 = vmax.f32 %v393, 0.0
    %v738 = vmax.f32 %v584, 0.0
    %v739 = vmax.f32 %v586, 0.0
    %v740 = vmax.f32 %v395, 0.0
    %v741 = vmax.f32 %v397, 0.0
    %v742 = vmax.f32 %v588, 0.0
    %v743 = vmax.f32 %v590, 0.0
    %v744 = vmax.f32 %v401, 0.0
    %v745 = vmax.f32 %v403, 0.0
    %v746 = vmax.f32 %v594, 0.0
    %v747 = vmax.f32 %v596, 0.0
    %v748 = vmax.f32 %v405, 0.0
    %v749 = vmax.f32 %v407, 0.0
    %v750 = vmax.f32 %v598, 0.0
    %v751 = vmax.f32 %v600, 0.0
    %v752 = vmax.f32 %v411, 0.0
    %v753 = vmax.f32 %v413, 0.0
    %v754 = vmax.f32 %v604, 0.0
    %v755 = vmax.f32 %v606, 0.0
    %v756 = vmax.f32 %v415, 0.0
    %v757 = vmax.f32 %v417, 0.0
    %v758 = vmax.f32 %v608, 0.0
    %v759 = vmax.f32 %v610, 0.0
    %v760 = vmax.f32 %v421, 0.0
    %v761 = vmax.f32 %v423, 0.0
    %v762 = vmax.f32 %v614, 0.0
    %v763 = vmax.f32 %v616, 0.0
    %v764 = vmax.f32 %v425, 0.0
    %v765 = vmax.f32 %v427, 0.0
    %v766 = vmax.f32 %v618, 0.0
    %v767 = vmax.f32 %v620, 0.0
    %v768 = vmax.f32 %v431, 0.0
    %v769 = vmax.f32 %v433, 0.0
    %v770 = vmax.f32 %v624, 0.0
    %v771 = vmax.f32 %v626, 0.0
    %v772 = vmax.f32 %v435, 0.0
    %v773 = vmax.f32 %v437, 0.0
    %v774 = vmax.f32 %v628, 0.0
    %v775 = vmax.f32 %v630, 0.0
    %v776 = vmax.f32 %v441, 0.0
    %v777 = vmax.f32 %v443, 0.0
    %v778 = vmax.f32 %v634, 0.0
    %v779 = vmax.f32 %v636, 0.0
    %v780 = vmax.f32 %v445, 0.0
    %v781 = vmax.f32 %v447, 0.0
    %v782 = vmax.f32 %v638, 0.0
    %v783 = vmax.f32 %v640, 0.0
    %v784 = vmax.f32 %v451, 0.0
    %v785 = vmax.f32 %v453, 0.0
    %v786 = vmax.f32 %v644, 0.0
    %v787 = vmax.f32 %v646, 0.0
    %v788 = vmax.f32 %v455, 0.0
    %v789 = vmax.f32 %v457, 0.0
    %v790 = vmax.f32 %v648, 0.0
    %v791 = vmax.f32 %v650, 0.0
    %v792 = vmax.f32 %v461, 0.0
    %v793 = vmax.f32 %v463, 0.0
    %v794 = vmax.f32 %v654, 0.0
    %v795 = vmax.f32 %v656, 0.0
    %v796 = vmax.f32 %v465, 0.0
    %v797 = vmax.f32 %v467, 0.0
    %v798 = vmax.f32 %v658, 0.0
    %v799 = vmax.f32 %v660, 0.0
    %v800 = vmax.f32 %v471, 0.0
    %v801 = vmax.f32 %v473, 0.0
    %v802 = vmax.f32 %v664, 0.0
    %v803 = vmax.f32 %v666, 0.0
    %v804 = vmax.f32 %v475, 0.0
    %v805 = vmax.f32 %v477, 0.0
    %v806 = vmax.f32 %v668, 0.0
    %v807 = vmax.f32 %v670, 0.0
    %v808 = vmax.f32 %v481, 0.0
    %v809 = vmax.f32 %v483, 0.0
    %v810 = vmax.f32 %v674, 0.0
    %v811 = vmax.f32 %v676, 0.0
    %v812 = vmax.f32 %v485, 0.0
    %v813 = vmax.f32 %v487, 0.0
    %v814 = vmax.f32 %v678, 0.0
    %v815 = vmax.f32 %v680, 0.0
    %v816 = vmax.f32 %v491, 0.0
    %v817 = vmax.f32 %v493, 0.0
    %v818 = vmax.f32 %v684, 0.0
    %v819 = vmax.f32 %v686, 0.0
    %v820 = vmax.f32 %v495, 0.0
    %v821 = vmax.f32 %v497, 0.0
    %v822 = vmax.f32 %v688, 0.0
    %v823 = vmax.f32 %v690, 0.0
    %v824 = vmax.f32 %v501, 0.0
    %v825 = vmax.f32 %v503, 0.0
    %v826 = vmax.f32 %v694, 0.0
    %v827 = vmax.f32 %v696, 0.0
    %v828 = vmax.f32 %v505, 0.0
    %v829 = vmax.f32 %v507, 0.0
    %v830 = vmax.f32 %v698, 0.0
    %v831 = vmax.f32 %v700, 0.0
    %v832 = vmax.f32 %v511, 0.0
    %v833 = vmax.f32 %v513, 0.0
    %v834 = vmax.f32 %v704, 0.0
    %v835 = vmax.f32 %v706, 0.0
    %v836 = vmax.f32 %v515, 0.0
    %v837 = vmax.f32 %v517, 0.0
    %v838 = vmax.f32 %v708, 0.0
    %v839 = vmax.f32 %v710, 0.0
    %v840 = vpack.c.bf16 %v716, %v712
    %v841 = vpack.c.bf16 %v717, %v713
    %v842 = vpack.c.bf16 %v718, %v714
    %v843 = vpack.c.bf16 %v719, %v715
    %v844 = vpack.c.bf16 %v724, %v720
    %v845 = vpack.c.bf16 %v725, %v721
    %v846 = vpack.c.bf16 %v726, %v722
    %v847 = vpack.c.bf16 %v727, %v723
    %v848 = vpack.c.bf16 %v732, %v728
    %v849 = vpack.c.bf16 %v733, %v729
    %v850 = vpack.c.bf16 %v734, %v730
    %v851 = vpack.c.bf16 %v735, %v731
    %v852 = vpack.c.bf16 %v740, %v736
    %v853 = vpack.c.bf16 %v741, %v737
    %v854 = vpack.c.bf16 %v742, %v738
    %v855 = vpack.c.bf16 %v743, %v739
    %v856 = vpack.c.bf16 %v748, %v744
    %v857 = vpack.c.bf16 %v749, %v745
    %v858 = vpack.c.bf16 %v750, %v746
    %v859 = vpack.c.bf16 %v751, %v747
    %v860 = vpack.c.bf16 %v756, %v752
    %v861 = vpack.c.bf16 %v757, %v753
    %v862 = vpack.c.bf16 %v758, %v754
    %v863 = vpack.c.bf16 %v759, %v755
    %v864 = vpack.c.bf16 %v764, %v760
    %v865 = vpack.c.bf16 %v765, %v761
    %v866 = vpack.c.bf16 %v766, %v762
    %v867 = vpack.c.bf16 %v767, %v763
    %v868 = vpack.c.bf16 %v772, %v768
    %v869 = vpack.c.bf16 %v773, %v769
    %v870 = vpack.c.bf16 %v774, %v770
    %v871 = vpack.c.bf16 %v775, %v771
    %v872 = vpack.c.bf16 %v780, %v776
    %v873 = vpack.c.bf16 %v781, %v777
    %v874 = vpack.c.bf16 %v782, %v778
    %v875 = vpack.c.bf16 %v783, %v779
    %v876 = vpack.c.bf16 %v788, %v784
    %v877 = vpack.c.bf16 %v789, %v785
    %v878 = vpack.c.bf16 %v790, %v786
    %v879 = vpack.c.bf16 %v791, %v787
    %v880 = vpack.c.bf16 %v796, %v792
    %v881 = vpack.c.bf16 %v797, %v793
    %v882 = vpack.c.bf16 %v798, %v794
    %v883 = vpack.c.bf16 %v799, %v795
    %v884 = vpack.c.bf16 %v804, %v800
    %v885 = vpack.c.bf16 %v805, %v801
    %v886 = vpack.c.bf16 %v806, %v802
    %v887 = vpack.c.bf16 %v807, %v803
    %v888 = vpack.c.bf16 %v812, %v808
    %v889 = vpack.c.bf16 %v813, %v809
    %v890 = vpack.c.bf16 %v814, %v810
    %v891 = vpack.c.bf16 %v815, %v811
    %v892 = vpack.c.bf16 %v820, %v816
    %v893 = vpack.c.bf16 %v821, %v817
    %v894 = vpack.c.bf16 %v822, %v818
    %v895 = vpack.c.bf16 %v823, %v819
    %v896 = vpack.c.bf16 %v828, %v824
    %v897 = vpack.c.bf16 %v829, %v825
    %v898 = vpack.c.bf16 %v830, %v826
    %v899 = vpack.c.bf16 %v831, %v827
    %v900 = vpack.c.bf16 %v836, %v832
    %v901 = vpack.c.bf16 %v837, %v833
    %v902 = vpack.c.bf16 %v838, %v834
    %v903 = vpack.c.bf16 %v839, %v835
    %v904 = vld [vmem:[#allocation2] sm:$0xff]
    %v905 = vld [vmem:[#allocation2 + $0x8] sm:$0xff]
    %v906 = vld [vmem:[#allocation2 + $0x10] sm:$0xff]
    %v907 = vld [vmem:[#allocation2 + $0x18] sm:$0xff]
    %v908 = vld [vmem:[#allocation2 + $0x20] sm:$0xff]
    %v909 = vld [vmem:[#allocation2 + $0x28] sm:$0xff]
    %v910 = vld [vmem:[#allocation2 + $0x30] sm:$0xff]
    %v911 = vld [vmem:[#allocation2 + $0x38] sm:$0xff]
    %v912 = vld [vmem:[#allocation2 + $0x40] sm:$0xff]
    %v913 = vld [vmem:[#allocation2 + $0x48] sm:$0xff]
    %v914 = vld [vmem:[#allocation2 + $0x50] sm:$0xff]
    %v915 = vld [vmem:[#allocation2 + $0x58] sm:$0xff]
    %v916 = vld [vmem:[#allocation2 + $0x60] sm:$0xff]
    %v917 = vld [vmem:[#allocation2 + $0x68] sm:$0xff]
    %v918 = vld [vmem:[#allocation2 + $0x70] sm:$0xff]
    %v919 = vld [vmem:[#allocation2 + $0x78] sm:$0xff]
    %v920 = vld [vmem:[#allocation2 + $0x80] sm:$0xff]
    %v921 = vld [vmem:[#allocation2 + $0x88] sm:$0xff]
    %v922 = vld [vmem:[#allocation2 + $0x90] sm:$0xff]
    %v923 = vld [vmem:[#allocation2 + $0x98] sm:$0xff]
    %v924 = vld [vmem:[#allocation2 + $0xa0] sm:$0xff]
    %v925 = vld [vmem:[#allocation2 + $0xa8] sm:$0xff]
    %v926 = vld [vmem:[#allocation2 + $0xb0] sm:$0xff]
    %v927 = vld [vmem:[#allocation2 + $0xb8] sm:$0xff]
    %v928 = vld [vmem:[#allocation2 + $0xc0] sm:$0xff]
    %v929 = vld [vmem:[#allocation2 + $0xc8] sm:$0xff]
    %v930 = vld [vmem:[#allocation2 + $0xd0] sm:$0xff]
    %v931 = vld [vmem:[#allocation2 + $0xd8] sm:$0xff]
    %v932 = vld [vmem:[#allocation2 + $0xe0] sm:$0xff]
    %v933 = vld [vmem:[#allocation2 + $0xe8] sm:$0xff]
    %v934 = vld [vmem:[#allocation2 + $0xf0] sm:$0xff]
    %v935 = vld [vmem:[#allocation2 + $0xf8] sm:$0xff]
    %v936 = vld [vmem:[#allocation2 + $0x100] sm:$0xff]
    %v937 = vld [vmem:[#allocation2 + $0x108] sm:$0xff]
    %v938 = vld [vmem:[#allocation2 + $0x110] sm:$0xff]
    %v939 = vld [vmem:[#allocation2 + $0x118] sm:$0xff]
    %v940 = vld [vmem:[#allocation2 + $0x120] sm:$0xff]
    %v941 = vld [vmem:[#allocation2 + $0x128] sm:$0xff]
    %v942 = vld [vmem:[#allocation2 + $0x130] sm:$0xff]
    %v943 = vld [vmem:[#allocation2 + $0x138] sm:$0xff]
    %v944 = vld [vmem:[#allocation2 + $0x140] sm:$0xff]
    %v945 = vld [vmem:[#allocation2 + $0x148] sm:$0xff]
    %v946 = vld [vmem:[#allocation2 + $0x150] sm:$0xff]
    %v947 = vld [vmem:[#allocation2 + $0x158] sm:$0xff]
    %v948 = vld [vmem:[#allocation2 + $0x160] sm:$0xff]
    %v949 = vld [vmem:[#allocation2 + $0x168] sm:$0xff]
    %v950 = vld [vmem:[#allocation2 + $0x170] sm:$0xff]
    %v951 = vld [vmem:[#allocation2 + $0x178] sm:$0xff]
    %v952 = vld [vmem:[#allocation2 + $0x180] sm:$0xff]
    %v953 = vld [vmem:[#allocation2 + $0x188] sm:$0xff]
    %v954 = vld [vmem:[#allocation2 + $0x190] sm:$0xff]
    %v955 = vld [vmem:[#allocation2 + $0x198] sm:$0xff]
    %v956 = vld [vmem:[#allocation2 + $0x1a0] sm:$0xff]
    %v957 = vld [vmem:[#allocation2 + $0x1a8] sm:$0xff]
    %v958 = vld [vmem:[#allocation2 + $0x1b0] sm:$0xff]
    %v959 = vld [vmem:[#allocation2 + $0x1b8] sm:$0xff]
    %v960 = vld [vmem:[#allocation2 + $0x1c0] sm:$0xff]
    %v961 = vld [vmem:[#allocation2 + $0x1c8] sm:$0xff]
    %v962 = vld [vmem:[#allocation2 + $0x1d0] sm:$0xff]
    %v963 = vld [vmem:[#allocation2 + $0x1d8] sm:$0xff]
    %v964 = vld [vmem:[#allocation2 + $0x1e0] sm:$0xff]
    %v965 = vld [vmem:[#allocation2 + $0x1e8] sm:$0xff]
    %v966 = vld [vmem:[#allocation2 + $0x1f0] sm:$0xff]
    %v967 = vld [vmem:[#allocation2 + $0x1f8] sm:$0xff]
    %v968 = vld [vmem:[%s4] sm:$0x3]
    %v970 = vlaneseq
    %v971 = vshrl.u32 %v970, 7
    %v972 = vsub.s32 0, %v971
    %v973 = vrot.slane %v968, %v972
    %v974 = vlaneseq
    %v975 = vshrl.u32 %v974, 7
    %v976 = vsub.s32 1, %v975
    %v977 = vrot.slane %v968, %v976
    %v1044 = vunpack.c.l.b16 %v904
    %v1045 = vunpack.c.h.b16 %v904
    %v1046 = vunpack.c.l.b16 %v905
    %v1047 = vunpack.c.h.b16 %v905
    %v1048 = vunpack.c.l.b16 %v906
    %v1049 = vunpack.c.h.b16 %v906
    %v1050 = vunpack.c.l.b16 %v907
    %v1051 = vunpack.c.h.b16 %v907
    %v1052 = vunpack.c.l.b16 %v908
    %v1053 = vunpack.c.h.b16 %v908
    %v1054 = vunpack.c.l.b16 %v909
    %v1055 = vunpack.c.h.b16 %v909
    %v1056 = vunpack.c.l.b16 %v910
    %v1057 = vunpack.c.h.b16 %v910
    %v1058 = vunpack.c.l.b16 %v911
    %v1059 = vunpack.c.h.b16 %v911
    %v1060 = vunpack.c.l.b16 %v912
    %v1061 = vunpack.c.h.b16 %v912
    %v1062 = vunpack.c.l.b16 %v913
    %v1063 = vunpack.c.h.b16 %v913
    %v1064 = vunpack.c.l.b16 %v914
    %v1065 = vunpack.c.h.b16 %v914
    %v1066 = vunpack.c.l.b16 %v915
    %v1067 = vunpack.c.h.b16 %v915
    %v1068 = vunpack.c.l.b16 %v916
    %v1069 = vunpack.c.h.b16 %v916
    %v1070 = vunpack.c.l.b16 %v917
    %v1071 = vunpack.c.h.b16 %v917
    %v1072 = vunpack.c.l.b16 %v918
    %v1073 = vunpack.c.h.b16 %v918
    %v1074 = vunpack.c.l.b16 %v919
    %v1075 = vunpack.c.h.b16 %v919
    %v1076 = vunpack.c.l.b16 %v920
    %v1077 = vunpack.c.h.b16 %v920
    %v1078 = vunpack.c.l.b16 %v921
    %v1079 = vunpack.c.h.b16 %v921
    %v1080 = vunpack.c.l.b16 %v922
    %v1081 = vunpack.c.h.b16 %v922
    %v1082 = vunpack.c.l.b16 %v923
    %v1083 = vunpack.c.h.b16 %v923
    %v1084 = vunpack.c.l.b16 %v924
    %v1085 = vunpack.c.h.b16 %v924
    %v1086 = vunpack.c.l.b16 %v925
    %v1087 = vunpack.c.h.b16 %v925
    %v1088 = vunpack.c.l.b16 %v926
    %v1089 = vunpack.c.h.b16 %v926
    %v1090 = vunpack.c.l.b16 %v927
    %v1091 = vunpack.c.h.b16 %v927
    %v1092 = vunpack.c.l.b16 %v928
    %v1093 = vunpack.c.h.b16 %v928
    %v1094 = vunpack.c.l.b16 %v929
    %v1095 = vunpack.c.h.b16 %v929
    %v1096 = vunpack.c.l.b16 %v930
    %v1097 = vunpack.c.h.b16 %v930
    %v1098 = vunpack.c.l.b16 %v931
    %v1099 = vunpack.c.h.b16 %v931
    %v1100 = vunpack.c.l.b16 %v932
    %v1101 = vunpack.c.h.b16 %v932
    %v1102 = vunpack.c.l.b16 %v933
    %v1103 = vunpack.c.h.b16 %v933
    %v1104 = vunpack.c.l.b16 %v934
    %v1105 = vunpack.c.h.b16 %v934
    %v1106 = vunpack.c.l.b16 %v935
    %v1107 = vunpack.c.h.b16 %v935
    %v1108 = vunpack.c.l.b16 %v936
    %v1109 = vunpack.c.h.b16 %v936
    %v1110 = vunpack.c.l.b16 %v937
    %v1111 = vunpack.c.h.b16 %v937
    %v1112 = vunpack.c.l.b16 %v938
    %v1113 = vunpack.c.h.b16 %v938
    %v1114 = vunpack.c.l.b16 %v939
    %v1115 = vunpack.c.h.b16 %v939
    %v1116 = vunpack.c.l.b16 %v940
    %v1117 = vunpack.c.h.b16 %v940
    %v1118 = vunpack.c.l.b16 %v941
    %v1119 = vunpack.c.h.b16 %v941
    %v1120 = vunpack.c.l.b16 %v942
    %v1121 = vunpack.c.h.b16 %v942
    %v1122 = vunpack.c.l.b16 %v943
    %v1123 = vunpack.c.h.b16 %v943
    %v1124 = vunpack.c.l.b16 %v944
    %v1125 = vunpack.c.h.b16 %v944
    %v1126 = vunpack.c.l.b16 %v945
    %v1127 = vunpack.c.h.b16 %v945
    %v1128 = vunpack.c.l.b16 %v946
    %v1129 = vunpack.c.h.b16 %v946
    %v1130 = vunpack.c.l.b16 %v947
    %v1131 = vunpack.c.h.b16 %v947
    %v1132 = vunpack.c.l.b16 %v948
    %v1133 = vunpack.c.h.b16 %v948
    %v1134 = vunpack.c.l.b16 %v949
    %v1135 = vunpack.c.h.b16 %v949
    %v1136 = vunpack.c.l.b16 %v950
    %v1137 = vunpack.c.h.b16 %v950
    %v1138 = vunpack.c.l.b16 %v951
    %v1139 = vunpack.c.h.b16 %v951
    %v1140 = vunpack.c.l.b16 %v952
    %v1141 = vunpack.c.h.b16 %v952
    %v1142 = vunpack.c.l.b16 %v953
    %v1143 = vunpack.c.h.b16 %v953
    %v1144 = vunpack.c.l.b16 %v954
    %v1145 = vunpack.c.h.b16 %v954
    %v1146 = vunpack.c.l.b16 %v955
    %v1147 = vunpack.c.h.b16 %v955
    %v1148 = vunpack.c.l.b16 %v956
    %v1149 = vunpack.c.h.b16 %v956
    %v1150 = vunpack.c.l.b16 %v957
    %v1151 = vunpack.c.h.b16 %v957
    %v1152 = vunpack.c.l.b16 %v958
    %v1153 = vunpack.c.h.b16 %v958
    %v1154 = vunpack.c.l.b16 %v959
    %v1155 = vunpack.c.h.b16 %v959
    %v1156 = vunpack.c.l.b16 %v960
    %v1157 = vunpack.c.h.b16 %v960
    %v1158 = vunpack.c.l.b16 %v961
    %v1159 = vunpack.c.h.b16 %v961
    %v1160 = vunpack.c.l.b16 %v962
    %v1161 = vunpack.c.h.b16 %v962
    %v1162 = vunpack.c.l.b16 %v963
    %v1163 = vunpack.c.h.b16 %v963
    %v1164 = vunpack.c.l.b16 %v964
    %v1165 = vunpack.c.h.b16 %v964
    %v1166 = vunpack.c.l.b16 %v965
    %v1167 = vunpack.c.h.b16 %v965
    %v1168 = vunpack.c.l.b16 %v966
    %v1169 = vunpack.c.h.b16 %v966
    %v1170 = vunpack.c.l.b16 %v967
    %v1171 = vunpack.c.h.b16 %v967
    %v1172 = vpack.c.b16 %v1046, %v1044
    %v1173 = vpack.c.b16 %v1047, %v1045
    %v1174 = vpack.c.b16 %v1050, %v1048
    %v1175 = vpack.c.b16 %v1051, %v1049
    %v1176 = vpack.c.b16 %v1054, %v1052
    %v1177 = vpack.c.b16 %v1055, %v1053
    %v1178 = vpack.c.b16 %v1058, %v1056
    %v1179 = vpack.c.b16 %v1059, %v1057
    %v1180 = vpack.c.b16 %v1062, %v1060
    %v1181 = vpack.c.b16 %v1063, %v1061
    %v1182 = vpack.c.b16 %v1066, %v1064
    %v1183 = vpack.c.b16 %v1067, %v1065
    %v1184 = vpack.c.b16 %v1070, %v1068
    %v1185 = vpack.c.b16 %v1071, %v1069
    %v1186 = vpack.c.b16 %v1074, %v1072
    %v1187 = vpack.c.b16 %v1075, %v1073
    %v1188 = vpack.c.b16 %v1078, %v1076
    %v1189 = vpack.c.b16 %v1079, %v1077
    %v1190 = vpack.c.b16 %v1082, %v1080
    %v1191 = vpack.c.b16 %v1083, %v1081
    %v1192 = vpack.c.b16 %v1086, %v1084
    %v1193 = vpack.c.b16 %v1087, %v1085
    %v1194 = vpack.c.b16 %v1090, %v1088
    %v1195 = vpack.c.b16 %v1091, %v1089
    %v1196 = vpack.c.b16 %v1094, %v1092
    %v1197 = vpack.c.b16 %v1095, %v1093
    %v1198 = vpack.c.b16 %v1098, %v1096
    %v1199 = vpack.c.b16 %v1099, %v1097
    %v1200 = vpack.c.b16 %v1102, %v1100
    %v1201 = vpack.c.b16 %v1103, %v1101
    %v1202 = vpack.c.b16 %v1106, %v1104
    %v1203 = vpack.c.b16 %v1107, %v1105
    %v1204 = vpack.c.b16 %v1110, %v1108
    %v1205 = vpack.c.b16 %v1111, %v1109
    %v1206 = vpack.c.b16 %v1114, %v1112
    %v1207 = vpack.c.b16 %v1115, %v1113
    %v1208 = vpack.c.b16 %v1118, %v1116
    %v1209 = vpack.c.b16 %v1119, %v1117
    %v1210 = vpack.c.b16 %v1122, %v1120
    %v1211 = vpack.c.b16 %v1123, %v1121
    %v1212 = vpack.c.b16 %v1126, %v1124
    %v1213 = vpack.c.b16 %v1127, %v1125
    %v1214 = vpack.c.b16 %v1130, %v1128
    %v1215 = vpack.c.b16 %v1131, %v1129
    %v1216 = vpack.c.b16 %v1134, %v1132
    %v1217 = vpack.c.b16 %v1135, %v1133
    %v1218 = vpack.c.b16 %v1138, %v1136
    %v1219 = vpack.c.b16 %v1139, %v1137
    %v1220 = vpack.c.b16 %v1142, %v1140
    %v1221 = vpack.c.b16 %v1143, %v1141
    %v1222 = vpack.c.b16 %v1146, %v1144
    %v1223 = vpack.c.b16 %v1147, %v1145
    %v1224 = vpack.c.b16 %v1150, %v1148
    %v1225 = vpack.c.b16 %v1151, %v1149
    %v1226 = vpack.c.b16 %v1154, %v1152
    %v1227 = vpack.c.b16 %v1155, %v1153
    %v1228 = vpack.c.b16 %v1158, %v1156
    %v1229 = vpack.c.b16 %v1159, %v1157
    %v1230 = vpack.c.b16 %v1162, %v1160
    %v1231 = vpack.c.b16 %v1163, %v1161
    %v1232 = vpack.c.b16 %v1166, %v1164
    %v1233 = vpack.c.b16 %v1167, %v1165
    %v1234 = vpack.c.b16 %v1170, %v1168
    %v1235 = vpack.c.b16 %v1171, %v1169
    %1300 = vmatprep.subr.bf16.mxu0 %v1173
    %1301 = vmatpush1.bf16.msra.mxu0 %v1172
    %1302 = vmatprep.subr.bf16.mxu0 %v1175
    %1303 = vmatpush1.bf16.msra.mxu0 %v1174
    %1304 = vmatprep.subr.bf16.mxu0 %v1177
    %1305 = vmatpush1.bf16.msra.mxu0 %v1176
    %1306 = vmatprep.subr.bf16.mxu0 %v1179
    %1307 = vmatpush1.bf16.msra.mxu0 %v1178
    %1308 = vmatprep.subr.bf16.mxu0 %v1181
    %1309 = vmatpush1.bf16.msra.mxu0 %v1180
    %1310 = vmatprep.subr.bf16.mxu0 %v1183
    %1311 = vmatpush1.bf16.msra.mxu0 %v1182
    %1312 = vmatprep.subr.bf16.mxu0 %v1185
    %1313 = vmatpush1.bf16.msra.mxu0 %v1184
    %1314 = vmatprep.subr.bf16.mxu0 %v1187
    %1315 = vmatpush1.bf16.msra.mxu0 %v1186
    %1316 = vmatprep.subr.bf16.mxu0 %v1189
    %1317 = vmatpush1.bf16.msra.mxu0 %v1188
    %1318 = vmatprep.subr.bf16.mxu0 %v1191
    %1319 = vmatpush1.bf16.msra.mxu0 %v1190
    %1320 = vmatprep.subr.bf16.mxu0 %v1193
    %1321 = vmatpush1.bf16.msra.mxu0 %v1192
    %1322 = vmatprep.subr.bf16.mxu0 %v1195
    %1323 = vmatpush1.bf16.msra.mxu0 %v1194
    %1324 = vmatprep.subr.bf16.mxu0 %v1197
    %1325 = vmatpush1.bf16.msra.mxu0 %v1196
    %1326 = vmatprep.subr.bf16.mxu0 %v1199
    %1327 = vmatpush1.bf16.msra.mxu0 %v1198
    %1328 = vmatprep.subr.bf16.mxu0 %v1201
    %1329 = vmatpush1.bf16.msra.mxu0 %v1200
    %1330 = vmatprep.subr.bf16.mxu0 %v1203
    %1331 = vmatpush1.bf16.msra.mxu0 %v1202
    %1332 = vmatprep.mubr.bf16.mxu0 %v841
    %1333 = vmatmul.mubr.bf16.gmra.mrb[0].mxu0 %v840
    %v1334 = vpop.f32.mrb[0].mxu0
    %v1335 = vadd.f32 %v973, %v1334
    %v1336 = vpop.f32.mrb[0].mxu0
    %v1337 = vadd.f32 %v977, %v1336
    %v1338 = vpop.f32.mrb[0].mxu0
    %v1339 = vadd.f32 %v973, %v1338
    %v1340 = vpop.f32.mrb[0].mxu0
    %v1341 = vadd.f32 %v977, %v1340
    %1342 = vmatprep.mubr.bf16.mxu0 %v845
    %1343 = vmatmul.mubr.bf16.gmra.mrb[0].mxu0 %v844
    %v1344 = vpop.f32.mrb[0].mxu0
    %v1345 = vadd.f32 %v973, %v1344
    %v1346 = vpop.f32.mrb[0].mxu0
    %v1347 = vadd.f32 %v977, %v1346
    %v1348 = vpop.f32.mrb[0].mxu0
    %v1349 = vadd.f32 %v973, %v1348
    %v1350 = vpop.f32.mrb[0].mxu0
    %v1351 = vadd.f32 %v977, %v1350
    %1352 = vmatprep.mubr.bf16.mxu0 %v849
    %1353 = vmatmul.mubr.bf16.gmra.mrb[0].mxu0 %v848
    %v1354 = vpop.f32.mrb[0].mxu0
    %v1355 = vadd.f32 %v973, %v1354
    %v1356 = vpop.f32.mrb[0].mxu0
    %v1357 = vadd.f32 %v977, %v1356
    %v1358 = vpop.f32.mrb[0].mxu0
    %v1359 = vadd.f32 %v973, %v1358
    %v1360 = vpop.f32.mrb[0].mxu0
    %v1361 = vadd.f32 %v977, %v1360
    %1362 = vmatprep.mubr.bf16.mxu0 %v853
    %1363 = vmatmul.mubr.bf16.gmra.mrb[0].mxu0 %v852
    %v1364 = vpop.f32.mrb[0].mxu0
    %v1365 = vadd.f32 %v973, %v1364
    %v1366 = vpop.f32.mrb[0].mxu0
    %v1367 = vadd.f32 %v977, %v1366
    %v1368 = vpop.f32.mrb[0].mxu0
    %v1369 = vadd.f32 %v973, %v1368
    %v1370 = vpop.f32.mrb[0].mxu0
    %v1371 = vadd.f32 %v977, %v1370
    %1372 = vmatprep.mubr.bf16.mxu0 %v857
    %1373 = vmatmul.mubr.bf16.gmra.mrb[0].mxu0 %v856
    %v1374 = vpop.f32.mrb[0].mxu0
    %v1375 = vadd.f32 %v973, %v1374
    %v1376 = vpop.f32.mrb[0].mxu0
    %v1377 = vadd.f32 %v977, %v1376
    %v1378 = vpop.f32.mrb[0].mxu0
    %v1379 = vadd.f32 %v973, %v1378
    %v1380 = vpop.f32.mrb[0].mxu0
    %v1381 = vadd.f32 %v977, %v1380
    %1382 = vmatprep.mubr.bf16.mxu0 %v861
    %1383 = vmatmul.mubr.bf16.gmra.mrb[0].mxu0 %v860
    %v1384 = vpop.f32.mrb[0].mxu0
    %v1385 = vadd.f32 %v973, %v1384
    %v1386 = vpop.f32.mrb[0].mxu0
    %v1387 = vadd.f32 %v977, %v1386
    %v1388 = vpop.f32.mrb[0].mxu0
    %v1389 = vadd.f32 %v973, %v1388
    %v1390 = vpop.f32.mrb[0].mxu0
    %v1391 = vadd.f32 %v977, %v1390
    %1392 = vmatprep.mubr.bf16.mxu0 %v865
    %1393 = vmatmul.mubr.bf16.gmra.mrb[0].mxu0 %v864
    %v1394 = vpop.f32.mrb[0].mxu0
    %v1395 = vadd.f32 %v973, %v1394
    %v1396 = vpop.f32.mrb[0].mxu0
    %v1397 = vadd.f32 %v977, %v1396
    %v1398 = vpop.f32.mrb[0].mxu0
    %v1399 = vadd.f32 %v973, %v1398
    %v1400 = vpop.f32.mrb[0].mxu0
    %v1401 = vadd.f32 %v977, %v1400
    %1402 = vmatprep.mubr.bf16.mxu0 %v869
    %1403 = vmatmul.mubr.bf16.gmra.mrb[0].mxu0 %v868
    %v1404 = vpop.f32.mrb[0].mxu0
    %v1405 = vadd.f32 %v973, %v1404
    %v1406 = vpop.f32.mrb[0].mxu0
    %v1407 = vadd.f32 %v977, %v1406
    %v1408 = vpop.f32.mrb[0].mxu0
    %v1409 = vadd.f32 %v973, %v1408
    %v1410 = vpop.f32.mrb[0].mxu0
    %v1411 = vadd.f32 %v977, %v1410
    %1412 = vmatprep.mubr.bf16.mxu0 %v873
    %1413 = vmatmul.mubr.bf16.gmra.mrb[0].mxu0 %v872
    %v1414 = vpop.f32.mrb[0].mxu0
    %v1415 = vadd.f32 %v973, %v1414
    %v1416 = vpop.f32.mrb[0].mxu0
    %v1417 = vadd.f32 %v977, %v1416
    %v1418 = vpop.f32.mrb[0].mxu0
    %v1419 = vadd.f32 %v973, %v1418
    %v1420 = vpop.f32.mrb[0].mxu0
    %v1421 = vadd.f32 %v977, %v1420
    %1422 = vmatprep.mubr.bf16.mxu0 %v877
    %1423 = vmatmul.mubr.bf16.gmra.mrb[0].mxu0 %v876
    %v1424 = vpop.f32.mrb[0].mxu0
    %v1425 = vadd.f32 %v973, %v1424
    %v1426 = vpop.f32.mrb[0].mxu0
    %v1427 = vadd.f32 %v977, %v1426
    %v1428 = vpop.f32.mrb[0].mxu0
    %v1429 = vadd.f32 %v973, %v1428
    %v1430 = vpop.f32.mrb[0].mxu0
    %v1431 = vadd.f32 %v977, %v1430
    %1432 = vmatprep.mubr.bf16.mxu0 %v881
    %1433 = vmatmul.mubr.bf16.gmra.mrb[0].mxu0 %v880
    %v1434 = vpop.f32.mrb[0].mxu0
    %v1435 = vadd.f32 %v973, %v1434
    %v1436 = vpop.f32.mrb[0].mxu0
    %v1437 = vadd.f32 %v977, %v1436
    %v1438 = vpop.f32.mrb[0].mxu0
    %v1439 = vadd.f32 %v973, %v1438
    %v1440 = vpop.f32.mrb[0].mxu0
    %v1441 = vadd.f32 %v977, %v1440
    %1442 = vmatprep.mubr.bf16.mxu0 %v885
    %1443 = vmatmul.mubr.bf16.gmra.mrb[0].mxu0 %v884
    %v1444 = vpop.f32.mrb[0].mxu0
    %v1445 = vadd.f32 %v973, %v1444
    %v1446 = vpop.f32.mrb[0].mxu0
    %v1447 = vadd.f32 %v977, %v1446
    %v1448 = vpop.f32.mrb[0].mxu0
    %v1449 = vadd.f32 %v973, %v1448
    %v1450 = vpop.f32.mrb[0].mxu0
    %v1451 = vadd.f32 %v977, %v1450
    %1452 = vmatprep.mubr.bf16.mxu0 %v889
    %1453 = vmatmul.mubr.bf16.gmra.mrb[0].mxu0 %v888
    %v1454 = vpop.f32.mrb[0].mxu0
    %v1455 = vadd.f32 %v973, %v1454
    %v1456 = vpop.f32.mrb[0].mxu0
    %v1457 = vadd.f32 %v977, %v1456
    %v1458 = vpop.f32.mrb[0].mxu0
    %v1459 = vadd.f32 %v973, %v1458
    %v1460 = vpop.f32.mrb[0].mxu0
    %v1461 = vadd.f32 %v977, %v1460
    %1462 = vmatprep.mubr.bf16.mxu0 %v893
    %1463 = vmatmul.mubr.bf16.gmra.mrb[0].mxu0 %v892
    %v1464 = vpop.f32.mrb[0].mxu0
    %v1465 = vadd.f32 %v973, %v1464
    %v1466 = vpop.f32.mrb[0].mxu0
    %v1467 = vadd.f32 %v977, %v1466
    %v1468 = vpop.f32.mrb[0].mxu0
    %v1469 = vadd.f32 %v973, %v1468
    %v1470 = vpop.f32.mrb[0].mxu0
    %v1471 = vadd.f32 %v977, %v1470
    %1472 = vmatprep.mubr.bf16.mxu0 %v897
    %1473 = vmatmul.mubr.bf16.gmra.mrb[0].mxu0 %v896
    %v1474 = vpop.f32.mrb[0].mxu0
    %v1475 = vadd.f32 %v973, %v1474
    %v1476 = vpop.f32.mrb[0].mxu0
    %v1477 = vadd.f32 %v977, %v1476
    %v1478 = vpop.f32.mrb[0].mxu0
    %v1479 = vadd.f32 %v973, %v1478
    %v1480 = vpop.f32.mrb[0].mxu0
    %v1481 = vadd.f32 %v977, %v1480
    %1482 = vmatprep.mubr.bf16.mxu0 %v901
    %1483 = vmatmul.mubr.bf16.gmra.mrb[0].mxu0 %v900
    %v1484 = vpop.f32.mrb[0].mxu0
    %v1485 = vadd.f32 %v973, %v1484
    %v1486 = vpop.f32.mrb[0].mxu0
    %v1487 = vadd.f32 %v977, %v1486
    %v1488 = vpop.f32.mrb[0].mxu0
    %v1489 = vadd.f32 %v973, %v1488
    %v1490 = vpop.f32.mrb[0].mxu0
    %v1491 = vadd.f32 %v977, %v1490
    %1492 = vdwg.mxu0
    %1493 = vmatprep.subr.bf16.mxu0 %v1205
    %1494 = vmatpush1.bf16.msra.mxu0 %v1204
    %1495 = vmatprep.subr.bf16.mxu0 %v1207
    %1496 = vmatpush1.bf16.msra.mxu0 %v1206
    %1497 = vmatprep.subr.bf16.mxu0 %v1209
    %1498 = vmatpush1.bf16.msra.mxu0 %v1208
    %1499 = vmatprep.subr.bf16.mxu0 %v1211
    %1500 = vmatpush1.bf16.msra.mxu0 %v1210
    %1501 = vmatprep.subr.bf16.mxu0 %v1213
    %1502 = vmatpush1.bf16.msra.mxu0 %v1212
    %1503 = vmatprep.subr.bf16.mxu0 %v1215
    %1504 = vmatpush1.bf16.msra.mxu0 %v1214
    %1505 = vmatprep.subr.bf16.mxu0 %v1217
    %1506 = vmatpush1.bf16.msra.mxu0 %v1216
    %1507 = vmatprep.subr.bf16.mxu0 %v1219
    %1508 = vmatpush1.bf16.msra.mxu0 %v1218
    %1509 = vmatprep.subr.bf16.mxu0 %v1221
    %1510 = vmatpush1.bf16.msra.mxu0 %v1220
    %1511 = vmatprep.subr.bf16.mxu0 %v1223
    %1512 = vmatpush1.bf16.msra.mxu0 %v1222
    %1513 = vmatprep.subr.bf16.mxu0 %v1225
    %1514 = vmatpush1.bf16.msra.mxu0 %v1224
    %1515 = vmatprep.subr.bf16.mxu0 %v1227
    %1516 = vmatpush1.bf16.msra.mxu0 %v1226
    %1517 = vmatprep.subr.bf16.mxu0 %v1229
    %1518 = vmatpush1.bf16.msra.mxu0 %v1228
    %1519 = vmatprep.subr.bf16.mxu0 %v1231
    %1520 = vmatpush1.bf16.msra.mxu0 %v1230
    %1521 = vmatprep.subr.bf16.mxu0 %v1233
    %1522 = vmatpush1.bf16.msra.mxu0 %v1232
    %1523 = vmatprep.subr.bf16.mxu0 %v1235
    %1524 = vmatpush1.bf16.msra.mxu0 %v1234
    %1525 = vmatprep.mubr.bf16.mxu0 %v843
    %1526 = vmatmul.mubr.bf16.gmra.mrb[0].mxu0 %v842
    %v1527 = vpop.f32.mrb[0].mxu0
    %v1528 = vadd.f32 %v1335, %v1527
    %v1529 = vpop.f32.mrb[0].mxu0
    %v1530 = vadd.f32 %v1337, %v1529
    %v1531 = vpop.f32.mrb[0].mxu0
    %v1532 = vadd.f32 %v1339, %v1531
    %v1533 = vpop.f32.mrb[0].mxu0
    %v1534 = vadd.f32 %v1341, %v1533
    %1535 = vmatprep.mubr.bf16.mxu0 %v847
    %1536 = vmatmul.mubr.bf16.gmra.mrb[0].mxu0 %v846
    %v1537 = vpop.f32.mrb[0].mxu0
    %v1538 = vadd.f32 %v1345, %v1537
    %v1539 = vpop.f32.mrb[0].mxu0
    %v1540 = vadd.f32 %v1347, %v1539
    %v1541 = vpop.f32.mrb[0].mxu0
    %v1542 = vadd.f32 %v1349, %v1541
    %v1543 = vpop.f32.mrb[0].mxu0
    %v1544 = vadd.f32 %v1351, %v1543
    %1545 = vmatprep.mubr.bf16.mxu0 %v851
    %1546 = vmatmul.mubr.bf16.gmra.mrb[0].mxu0 %v850
    %v1547 = vpop.f32.mrb[0].mxu0
    %v1548 = vadd.f32 %v1355, %v1547
    %v1549 = vpop.f32.mrb[0].mxu0
    %v1550 = vadd.f32 %v1357, %v1549
    %v1551 = vpop.f32.mrb[0].mxu0
    %v1552 = vadd.f32 %v1359, %v1551
    %v1553 = vpop.f32.mrb[0].mxu0
    %v1554 = vadd.f32 %v1361, %v1553
    %1555 = vmatprep.mubr.bf16.mxu0 %v855
    %1556 = vmatmul.mubr.bf16.gmra.mrb[0].mxu0 %v854
    %v1557 = vpop.f32.mrb[0].mxu0
    %v1558 = vadd.f32 %v1365, %v1557
    %v1559 = vpop.f32.mrb[0].mxu0
    %v1560 = vadd.f32 %v1367, %v1559
    %v1561 = vpop.f32.mrb[0].mxu0
    %v1562 = vadd.f32 %v1369, %v1561
    %v1563 = vpop.f32.mrb[0].mxu0
    %v1564 = vadd.f32 %v1371, %v1563
    %1565 = vmatprep.mubr.bf16.mxu0 %v859
    %1566 = vmatmul.mubr.bf16.gmra.mrb[0].mxu0 %v858
    %v1567 = vpop.f32.mrb[0].mxu0
    %v1568 = vadd.f32 %v1375, %v1567
    %v1569 = vpop.f32.mrb[0].mxu0
    %v1570 = vadd.f32 %v1377, %v1569
    %v1571 = vpop.f32.mrb[0].mxu0
    %v1572 = vadd.f32 %v1379, %v1571
    %v1573 = vpop.f32.mrb[0].mxu0
    %v1574 = vadd.f32 %v1381, %v1573
    %1575 = vmatprep.mubr.bf16.mxu0 %v863
    %1576 = vmatmul.mubr.bf16.gmra.mrb[0].mxu0 %v862
    %v1577 = vpop.f32.mrb[0].mxu0
    %v1578 = vadd.f32 %v1385, %v1577
    %v1579 = vpop.f32.mrb[0].mxu0
    %v1580 = vadd.f32 %v1387, %v1579
    %v1581 = vpop.f32.mrb[0].mxu0
    %v1582 = vadd.f32 %v1389, %v1581
    %v1583 = vpop.f32.mrb[0].mxu0
    %v1584 = vadd.f32 %v1391, %v1583
    %1585 = vmatprep.mubr.bf16.mxu0 %v867
    %1586 = vmatmul.mubr.bf16.gmra.mrb[0].mxu0 %v866
    %v1587 = vpop.f32.mrb[0].mxu0
    %v1588 = vadd.f32 %v1395, %v1587
    %v1589 = vpop.f32.mrb[0].mxu0
    %v1590 = vadd.f32 %v1397, %v1589
    %v1591 = vpop.f32.mrb[0].mxu0
    %v1592 = vadd.f32 %v1399, %v1591
    %v1593 = vpop.f32.mrb[0].mxu0
    %v1594 = vadd.f32 %v1401, %v1593
    %1595 = vmatprep.mubr.bf16.mxu0 %v871
    %1596 = vmatmul.mubr.bf16.gmra.mrb[0].mxu0 %v870
    %v1597 = vpop.f32.mrb[0].mxu0
    %v1598 = vadd.f32 %v1405, %v1597
    %v1599 = vpop.f32.mrb[0].mxu0
    %v1600 = vadd.f32 %v1407, %v1599
    %v1601 = vpop.f32.mrb[0].mxu0
    %v1602 = vadd.f32 %v1409, %v1601
    %v1603 = vpop.f32.mrb[0].mxu0
    %v1604 = vadd.f32 %v1411, %v1603
    %1605 = vmatprep.mubr.bf16.mxu0 %v875
    %1606 = vmatmul.mubr.bf16.gmra.mrb[0].mxu0 %v874
    %v1607 = vpop.f32.mrb[0].mxu0
    %v1608 = vadd.f32 %v1415, %v1607
    %v1609 = vpop.f32.mrb[0].mxu0
    %v1610 = vadd.f32 %v1417, %v1609
    %v1611 = vpop.f32.mrb[0].mxu0
    %v1612 = vadd.f32 %v1419, %v1611
    %v1613 = vpop.f32.mrb[0].mxu0
    %v1614 = vadd.f32 %v1421, %v1613
    %1615 = vmatprep.mubr.bf16.mxu0 %v879
    %1616 = vmatmul.mubr.bf16.gmra.mrb[0].mxu0 %v878
    %v1617 = vpop.f32.mrb[0].mxu0
    %v1618 = vadd.f32 %v1425, %v1617
    %v1619 = vpop.f32.mrb[0].mxu0
    %v1620 = vadd.f32 %v1427, %v1619
    %v1621 = vpop.f32.mrb[0].mxu0
    %v1622 = vadd.f32 %v1429, %v1621
    %v1623 = vpop.f32.mrb[0].mxu0
    %v1624 = vadd.f32 %v1431, %v1623
    %1625 = vmatprep.mubr.bf16.mxu0 %v883
    %1626 = vmatmul.mubr.bf16.gmra.mrb[0].mxu0 %v882
    %v1627 = vpop.f32.mrb[0].mxu0
    %v1628 = vadd.f32 %v1435, %v1627
    %v1629 = vpop.f32.mrb[0].mxu0
    %v1630 = vadd.f32 %v1437, %v1629
    %v1631 = vpop.f32.mrb[0].mxu0
    %v1632 = vadd.f32 %v1439, %v1631
    %v1633 = vpop.f32.mrb[0].mxu0
    %v1634 = vadd.f32 %v1441, %v1633
    %1635 = vmatprep.mubr.bf16.mxu0 %v887
    %1636 = vmatmul.mubr.bf16.gmra.mrb[0].mxu0 %v886
    %v1637 = vpop.f32.mrb[0].mxu0
    %v1638 = vadd.f32 %v1445, %v1637
    %v1639 = vpop.f32.mrb[0].mxu0
    %v1640 = vadd.f32 %v1447, %v1639
    %v1641 = vpop.f32.mrb[0].mxu0
    %v1642 = vadd.f32 %v1449, %v1641
    %v1643 = vpop.f32.mrb[0].mxu0
    %v1644 = vadd.f32 %v1451, %v1643
    %1645 = vmatprep.mubr.bf16.mxu0 %v891
    %1646 = vmatmul.mubr.bf16.gmra.mrb[0].mxu0 %v890
    %v1647 = vpop.f32.mrb[0].mxu0
    %v1648 = vadd.f32 %v1455, %v1647
    %v1649 = vpop.f32.mrb[0].mxu0
    %v1650 = vadd.f32 %v1457, %v1649
    %v1651 = vpop.f32.mrb[0].mxu0
    %v1652 = vadd.f32 %v1459, %v1651
    %v1653 = vpop.f32.mrb[0].mxu0
    %v1654 = vadd.f32 %v1461, %v1653
    %1655 = vmatprep.mubr.bf16.mxu0 %v895
    %1656 = vmatmul.mubr.bf16.gmra.mrb[0].mxu0 %v894
    %v1657 = vpop.f32.mrb[0].mxu0
    %v1658 = vadd.f32 %v1465, %v1657
    %v1659 = vpop.f32.mrb[0].mxu0
    %v1660 = vadd.f32 %v1467, %v1659
    %v1661 = vpop.f32.mrb[0].mxu0
    %v1662 = vadd.f32 %v1469, %v1661
    %v1663 = vpop.f32.mrb[0].mxu0
    %v1664 = vadd.f32 %v1471, %v1663
    %1665 = vmatprep.mubr.bf16.mxu0 %v899
    %1666 = vmatmul.mubr.bf16.gmra.mrb[0].mxu0 %v898
    %v1667 = vpop.f32.mrb[0].mxu0
    %v1668 = vadd.f32 %v1475, %v1667
    %v1669 = vpop.f32.mrb[0].mxu0
    %v1670 = vadd.f32 %v1477, %v1669
    %v1671 = vpop.f32.mrb[0].mxu0
    %v1672 = vadd.f32 %v1479, %v1671
    %v1673 = vpop.f32.mrb[0].mxu0
    %v1674 = vadd.f32 %v1481, %v1673
    %1675 = vmatprep.mubr.bf16.mxu0 %v903
    %1676 = vmatmul.mubr.bf16.gmra.mrb[0].mxu0 %v902
    %v1677 = vpop.f32.mrb[0].mxu0
    %v1678 = vadd.f32 %v1485, %v1677
    %v1679 = vpop.f32.mrb[0].mxu0
    %v1680 = vadd.f32 %v1487, %v1679
    %v1681 = vpop.f32.mrb[0].mxu0
    %v1682 = vadd.f32 %v1489, %v1681
    %v1683 = vpop.f32.mrb[0].mxu0
    %v1684 = vadd.f32 %v1491, %v1683
    %1685 = vdwg.mxu0
    %v1686 = vmax.f32 %v1528, 0.0
    %v1687 = vmax.f32 %v1530, 0.0
    %v1688 = vmax.f32 %v1532, 0.0
    %v1689 = vmax.f32 %v1534, 0.0
    %v1690 = vmax.f32 %v1538, 0.0
    %v1691 = vmax.f32 %v1540, 0.0
    %v1692 = vmax.f32 %v1542, 0.0
    %v1693 = vmax.f32 %v1544, 0.0
    %v1694 = vmax.f32 %v1548, 0.0
    %v1695 = vmax.f32 %v1550, 0.0
    %v1696 = vmax.f32 %v1552, 0.0
    %v1697 = vmax.f32 %v1554, 0.0
    %v1698 = vmax.f32 %v1558, 0.0
    %v1699 = vmax.f32 %v1560, 0.0
    %v1700 = vmax.f32 %v1562, 0.0
    %v1701 = vmax.f32 %v1564, 0.0
    %v1702 = vmax.f32 %v1568, 0.0
    %v1703 = vmax.f32 %v1570, 0.0
    %v1704 = vmax.f32 %v1572, 0.0
    %v1705 = vmax.f32 %v1574, 0.0
    %v1706 = vmax.f32 %v1578, 0.0
    %v1707 = vmax.f32 %v1580, 0.0
    %v1708 = vmax.f32 %v1582, 0.0
    %v1709 = vmax.f32 %v1584, 0.0
    %v1710 = vmax.f32 %v1588, 0.0
    %v1711 = vmax.f32 %v1590, 0.0
    %v1712 = vmax.f32 %v1592, 0.0
    %v1713 = vmax.f32 %v1594, 0.0
    %v1714 = vmax.f32 %v1598, 0.0
    %v1715 = vmax.f32 %v1600, 0.0
    %v1716 = vmax.f32 %v1602, 0.0
    %v1717 = vmax.f32 %v1604, 0.0
    %v1718 = vmax.f32 %v1608, 0.0
    %v1719 = vmax.f32 %v1610, 0.0
    %v1720 = vmax.f32 %v1612, 0.0
    %v1721 = vmax.f32 %v1614, 0.0
    %v1722 = vmax.f32 %v1618, 0.0
    %v1723 = vmax.f32 %v1620, 0.0
    %v1724 = vmax.f32 %v1622, 0.0
    %v1725 = vmax.f32 %v1624, 0.0
    %v1726 = vmax.f32 %v1628, 0.0
    %v1727 = vmax.f32 %v1630, 0.0
    %v1728 = vmax.f32 %v1632, 0.0
    %v1729 = vmax.f32 %v1634, 0.0
    %v1730 = vmax.f32 %v1638, 0.0
    %v1731 = vmax.f32 %v1640, 0.0
    %v1732 = vmax.f32 %v1642, 0.0
    %v1733 = vmax.f32 %v1644, 0.0
    %v1734 = vmax.f32 %v1648, 0.0
    %v1735 = vmax.f32 %v1650, 0.0
    %v1736 = vmax.f32 %v1652, 0.0
    %v1737 = vmax.f32 %v1654, 0.0
    %v1738 = vmax.f32 %v1658, 0.0
    %v1739 = vmax.f32 %v1660, 0.0
    %v1740 = vmax.f32 %v1662, 0.0
    %v1741 = vmax.f32 %v1664, 0.0
    %v1742 = vmax.f32 %v1668, 0.0
    %v1743 = vmax.f32 %v1670, 0.0
    %v1744 = vmax.f32 %v1672, 0.0
    %v1745 = vmax.f32 %v1674, 0.0
    %v1746 = vmax.f32 %v1678, 0.0
    %v1747 = vmax.f32 %v1680, 0.0
    %v1748 = vmax.f32 %v1682, 0.0
    %v1749 = vmax.f32 %v1684, 0.0
    %v1750 = vpack.c.bf16 %v1688, %v1686
    %v1751 = vpack.c.bf16 %v1689, %v1687
    %v1752 = vpack.c.bf16 %v1692, %v1690
    %v1753 = vpack.c.bf16 %v1693, %v1691
    %v1754 = vpack.c.bf16 %v1696, %v1694
    %v1755 = vpack.c.bf16 %v1697, %v1695
    %v1756 = vpack.c.bf16 %v1700, %v1698
    %v1757 = vpack.c.bf16 %v1701, %v1699
    %v1758 = vpack.c.bf16 %v1704, %v1702
    %v1759 = vpack.c.bf16 %v1705, %v1703
    %v1760 = vpack.c.bf16 %v1708, %v1706
    %v1761 = vpack.c.bf16 %v1709, %v1707
    %v1762 = vpack.c.bf16 %v1712, %v1710
    %v1763 = vpack.c.bf16 %v1713, %v1711
    %v1764 = vpack.c.bf16 %v1716, %v1714
    %v1765 = vpack.c.bf16 %v1717, %v1715
    %v1766 = vpack.c.bf16 %v1720, %v1718
    %v1767 = vpack.c.bf16 %v1721, %v1719
    %v1768 = vpack.c.bf16 %v1724, %v1722
    %v1769 = vpack.c.bf16 %v1725, %v1723
    %v1770 = vpack.c.bf16 %v1728, %v1726
    %v1771 = vpack.c.bf16 %v1729, %v1727
    %v1772 = vpack.c.bf16 %v1732, %v1730
    %v1773 = vpack.c.bf16 %v1733, %v1731
    %v1774 = vpack.c.bf16 %v1736, %v1734
    %v1775 = vpack.c.bf16 %v1737, %v1735
    %v1776 = vpack.c.bf16 %v1740, %v1738
    %v1777 = vpack.c.bf16 %v1741, %v1739
    %v1778 = vpack.c.bf16 %v1744, %v1742
    %v1779 = vpack.c.bf16 %v1745, %v1743
    %v1780 = vpack.c.bf16 %v1748, %v1746
    %v1781 = vpack.c.bf16 %v1749, %v1747
    %v1782 = vld [vmem:[%s5] sm:$0xf]
    %v1783 = vld [vmem:[%s5 + $0x4] sm:$0xf]
    %v1784 = vld [vmem:[%s5 + $0x8] sm:$0xf]
    %v1785 = vld [vmem:[%s5 + $0xc] sm:$0xf]
    %v1786 = vld [vmem:[%s5 + $0x10] sm:$0xf]
    %v1787 = vld [vmem:[%s5 + $0x14] sm:$0xf]
    %v1788 = vld [vmem:[%s5 + $0x18] sm:$0xf]
    %v1789 = vld [vmem:[%s5 + $0x1c] sm:$0xf]
    %v1790 = vld [vmem:[%s5 + $0x20] sm:$0xf]
    %v1791 = vld [vmem:[%s5 + $0x24] sm:$0xf]
    %v1792 = vld [vmem:[%s5 + $0x28] sm:$0xf]
    %v1793 = vld [vmem:[%s5 + $0x2c] sm:$0xf]
    %v1794 = vld [vmem:[%s5 + $0x30] sm:$0xf]
    %v1795 = vld [vmem:[%s5 + $0x34] sm:$0xf]
    %v1796 = vld [vmem:[%s5 + $0x38] sm:$0xf]
    %v1797 = vld [vmem:[%s5 + $0x3c] sm:$0xf]
    %v1798 = vld [vmem:[%s5 + $0x40] sm:$0xf]
    %v1799 = vld [vmem:[%s5 + $0x44] sm:$0xf]
    %v1800 = vld [vmem:[%s5 + $0x48] sm:$0xf]
    %v1801 = vld [vmem:[%s5 + $0x4c] sm:$0xf]
    %v1802 = vld [vmem:[%s5 + $0x50] sm:$0xf]
    %v1803 = vld [vmem:[%s5 + $0x54] sm:$0xf]
    %v1804 = vld [vmem:[%s5 + $0x58] sm:$0xf]
    %v1805 = vld [vmem:[%s5 + $0x5c] sm:$0xf]
    %v1806 = vld [vmem:[%s5 + $0x60] sm:$0xf]
    %v1807 = vld [vmem:[%s5 + $0x64] sm:$0xf]
    %v1808 = vld [vmem:[%s5 + $0x68] sm:$0xf]
    %v1809 = vld [vmem:[%s5 + $0x6c] sm:$0xf]
    %v1810 = vld [vmem:[%s5 + $0x70] sm:$0xf]
    %v1811 = vld [vmem:[%s5 + $0x74] sm:$0xf]
    %v1812 = vld [vmem:[%s5 + $0x78] sm:$0xf]
    %v1813 = vld [vmem:[%s5 + $0x7c] sm:$0xf]
    %v1814 = vld [vmem:[%s6] sm:$0x1]
    %v1816 = vlaneseq
    %v1817 = vshrl.u32 %v1816, 7
    %v1818 = vsub.s32 0, %v1817
    %v1819 = vrot.slane %v1814, %v1818
    %v1853 = vunpack.c.l.b16 %v1782
    %v1854 = vunpack.c.l.b16 %v1783
    %v1855 = vunpack.c.l.b16 %v1784
    %v1856 = vunpack.c.l.b16 %v1785
    %v1857 = vunpack.c.l.b16 %v1786
    %v1858 = vunpack.c.l.b16 %v1787
    %v1859 = vunpack.c.l.b16 %v1788
    %v1860 = vunpack.c.l.b16 %v1789
    %v1861 = vunpack.c.l.b16 %v1790
    %v1862 = vunpack.c.l.b16 %v1791
    %v1863 = vunpack.c.l.b16 %v1792
    %v1864 = vunpack.c.l.b16 %v1793
    %v1865 = vunpack.c.l.b16 %v1794
    %v1866 = vunpack.c.l.b16 %v1795
    %v1867 = vunpack.c.l.b16 %v1796
    %v1868 = vunpack.c.l.b16 %v1797
    %v1869 = vunpack.c.l.b16 %v1798
    %v1870 = vunpack.c.l.b16 %v1799
    %v1871 = vunpack.c.l.b16 %v1800
    %v1872 = vunpack.c.l.b16 %v1801
    %v1873 = vunpack.c.l.b16 %v1802
    %v1874 = vunpack.c.l.b16 %v1803
    %v1875 = vunpack.c.l.b16 %v1804
    %v1876 = vunpack.c.l.b16 %v1805
    %v1877 = vunpack.c.l.b16 %v1806
    %v1878 = vunpack.c.l.b16 %v1807
    %v1879 = vunpack.c.l.b16 %v1808
    %v1880 = vunpack.c.l.b16 %v1809
    %v1881 = vunpack.c.l.b16 %v1810
    %v1882 = vunpack.c.l.b16 %v1811
    %v1883 = vunpack.c.l.b16 %v1812
    %v1884 = vunpack.c.l.b16 %v1813
    %v1885 = vpack.c.b16 %v1854, %v1853
    %v1886 = vpack.c.b16 %v1856, %v1855
    %v1887 = vpack.c.b16 %v1858, %v1857
    %v1888 = vpack.c.b16 %v1860, %v1859
    %v1889 = vpack.c.b16 %v1862, %v1861
    %v1890 = vpack.c.b16 %v1864, %v1863
    %v1891 = vpack.c.b16 %v1866, %v1865
    %v1892 = vpack.c.b16 %v1868, %v1867
    %v1893 = vpack.c.b16 %v1870, %v1869
    %v1894 = vpack.c.b16 %v1872, %v1871
    %v1895 = vpack.c.b16 %v1874, %v1873
    %v1896 = vpack.c.b16 %v1876, %v1875
    %v1897 = vpack.c.b16 %v1878, %v1877
    %v1898 = vpack.c.b16 %v1880, %v1879
    %v1899 = vpack.c.b16 %v1882, %v1881
    %v1900 = vpack.c.b16 %v1884, %v1883
    %1917 = vmatprep.subr.bf16.mxu0 0
    %1918 = vmatpush1.bf16.msra.mxu0 %v1885
    %1919 = vmatprep.subr.bf16.mxu0 0
    %1920 = vmatpush1.bf16.msra.mxu0 %v1886
    %1921 = vmatprep.subr.bf16.mxu0 0
    %1922 = vmatpush1.bf16.msra.mxu0 %v1887
    %1923 = vmatprep.subr.bf16.mxu0 0
    %1924 = vmatpush1.bf16.msra.mxu0 %v1888
    %1925 = vmatprep.subr.bf16.mxu0 0
    %1926 = vmatpush1.bf16.msra.mxu0 %v1889
    %1927 = vmatprep.subr.bf16.mxu0 0
    %1928 = vmatpush1.bf16.msra.mxu0 %v1890
    %1929 = vmatprep.subr.bf16.mxu0 0
    %1930 = vmatpush1.bf16.msra.mxu0 %v1891
    %1931 = vmatprep.subr.bf16.mxu0 0
    %1932 = vmatpush1.bf16.msra.mxu0 %v1892
    %1933 = vmatprep.subr.bf16.mxu0 0
    %1934 = vmatpush1.bf16.msra.mxu0 %v1893
    %1935 = vmatprep.subr.bf16.mxu0 0
    %1936 = vmatpush1.bf16.msra.mxu0 %v1894
    %1937 = vmatprep.subr.bf16.mxu0 0
    %1938 = vmatpush1.bf16.msra.mxu0 %v1895
    %1939 = vmatprep.subr.bf16.mxu0 0
    %1940 = vmatpush1.bf16.msra.mxu0 %v1896
    %1941 = vmatprep.subr.bf16.mxu0 0
    %1942 = vmatpush1.bf16.msra.mxu0 %v1897
    %1943 = vmatprep.subr.bf16.mxu0 0
    %1944 = vmatpush1.bf16.msra.mxu0 %v1898
    %1945 = vmatprep.subr.bf16.mxu0 0
    %1946 = vmatpush1.bf16.msra.mxu0 %v1899
    %1947 = vmatprep.subr.bf16.mxu0 0
    %1948 = vmatpush1.bf16.msra.mxu0 %v1900
    %1949 = vmatprep.mubr.bf16.mxu0 %v1751
    %1950 = vmatmul.mubr.bf16.gmra.mrb[0].mxu0 %v1750
    %v1951 = vpop.f32.mrb[0].mxu0
    %v1952 = vadd.f32 %v1819, %v1951
    %v1953 = vpop.f32.mrb[0].mxu0
    %v1954 = vpop.f32.mrb[0].mxu0
    %v1955 = vadd.f32 %v1819, %v1954
    %v1956 = vpop.f32.mrb[0].mxu0
    %1957 = vmatprep.mubr.bf16.mxu0 %v1753
    %1958 = vmatmul.mubr.bf16.gmra.mrb[0].mxu0 %v1752
    %v1959 = vpop.f32.mrb[0].mxu0
    %v1960 = vadd.f32 %v1819, %v1959
    %v1961 = vpop.f32.mrb[0].mxu0
    %v1962 = vpop.f32.mrb[0].mxu0
    %v1963 = vadd.f32 %v1819, %v1962
    %v1964 = vpop.f32.mrb[0].mxu0
    %1965 = vmatprep.mubr.bf16.mxu0 %v1755
    %1966 = vmatmul.mubr.bf16.gmra.mrb[0].mxu0 %v1754
    %v1967 = vpop.f32.mrb[0].mxu0
    %v1968 = vadd.f32 %v1819, %v1967
    %v1969 = vpop.f32.mrb[0].mxu0
    %v1970 = vpop.f32.mrb[0].mxu0
    %v1971 = vadd.f32 %v1819, %v1970
    %v1972 = vpop.f32.mrb[0].mxu0
    %1973 = vmatprep.mubr.bf16.mxu0 %v1757
    %1974 = vmatmul.mubr.bf16.gmra.mrb[0].mxu0 %v1756
    %v1975 = vpop.f32.mrb[0].mxu0
    %v1976 = vadd.f32 %v1819, %v1975
    %v1977 = vpop.f32.mrb[0].mxu0
    %v1978 = vpop.f32.mrb[0].mxu0
    %v1979 = vadd.f32 %v1819, %v1978
    %v1980 = vpop.f32.mrb[0].mxu0
    %1981 = vmatprep.mubr.bf16.mxu0 %v1759
    %1982 = vmatmul.mubr.bf16.gmra.mrb[0].mxu0 %v1758
    %v1983 = vpop.f32.mrb[0].mxu0
    %v1984 = vadd.f32 %v1819, %v1983
    %v1985 = vpop.f32.mrb[0].mxu0
    %v1986 = vpop.f32.mrb[0].mxu0
    %v1987 = vadd.f32 %v1819, %v1986
    %v1988 = vpop.f32.mrb[0].mxu0
    %1989 = vmatprep.mubr.bf16.mxu0 %v1761
    %1990 = vmatmul.mubr.bf16.gmra.mrb[0].mxu0 %v1760
    %v1991 = vpop.f32.mrb[0].mxu0
    %v1992 = vadd.f32 %v1819, %v1991
    %v1993 = vpop.f32.mrb[0].mxu0
    %v1994 = vpop.f32.mrb[0].mxu0
    %v1995 = vadd.f32 %v1819, %v1994
    %v1996 = vpop.f32.mrb[0].mxu0
    %1997 = vmatprep.mubr.bf16.mxu0 %v1763
    %1998 = vmatmul.mubr.bf16.gmra.mrb[0].mxu0 %v1762
    %v1999 = vpop.f32.mrb[0].mxu0
    %v2000 = vadd.f32 %v1819, %v1999
    %v2001 = vpop.f32.mrb[0].mxu0
    %v2002 = vpop.f32.mrb[0].mxu0
    %v2003 = vadd.f32 %v1819, %v2002
    %v2004 = vpop.f32.mrb[0].mxu0
    %2005 = vmatprep.mubr.bf16.mxu0 %v1765
    %2006 = vmatmul.mubr.bf16.gmra.mrb[0].mxu0 %v1764
    %v2007 = vpop.f32.mrb[0].mxu0
    %v2008 = vadd.f32 %v1819, %v2007
    %v2009 = vpop.f32.mrb[0].mxu0
    %v2010 = vpop.f32.mrb[0].mxu0
    %v2011 = vadd.f32 %v1819, %v2010
    %v2012 = vpop.f32.mrb[0].mxu0
    %2013 = vmatprep.mubr.bf16.mxu0 %v1767
    %2014 = vmatmul.mubr.bf16.gmra.mrb[0].mxu0 %v1766
    %v2015 = vpop.f32.mrb[0].mxu0
    %v2016 = vadd.f32 %v1819, %v2015
    %v2017 = vpop.f32.mrb[0].mxu0
    %v2018 = vpop.f32.mrb[0].mxu0
    %v2019 = vadd.f32 %v1819, %v2018
    %v2020 = vpop.f32.mrb[0].mxu0
    %2021 = vmatprep.mubr.bf16.mxu0 %v1769
    %2022 = vmatmul.mubr.bf16.gmra.mrb[0].mxu0 %v1768
    %v2023 = vpop.f32.mrb[0].mxu0
    %v2024 = vadd.f32 %v1819, %v2023
    %v2025 = vpop.f32.mrb[0].mxu0
    %v2026 = vpop.f32.mrb[0].mxu0
    %v2027 = vadd.f32 %v1819, %v2026
    %v2028 = vpop.f32.mrb[0].mxu0
    %2029 = vmatprep.mubr.bf16.mxu0 %v1771
    %2030 = vmatmul.mubr.bf16.gmra.mrb[0].mxu0 %v1770
    %v2031 = vpop.f32.mrb[0].mxu0
    %v2032 = vadd.f32 %v1819, %v2031
    %v2033 = vpop.f32.mrb[0].mxu0
    %v2034 = vpop.f32.mrb[0].mxu0
    %v2035 = vadd.f32 %v1819, %v2034
    %v2036 = vpop.f32.mrb[0].mxu0
    %2037 = vmatprep.mubr.bf16.mxu0 %v1773
    %2038 = vmatmul.mubr.bf16.gmra.mrb[0].mxu0 %v1772
    %v2039 = vpop.f32.mrb[0].mxu0
    %v2040 = vadd.f32 %v1819, %v2039
    %v2041 = vpop.f32.mrb[0].mxu0
    %v2042 = vpop.f32.mrb[0].mxu0
    %v2043 = vadd.f32 %v1819, %v2042
    %v2044 = vpop.f32.mrb[0].mxu0
    %2045 = vmatprep.mubr.bf16.mxu0 %v1775
    %2046 = vmatmul.mubr.bf16.gmra.mrb[0].mxu0 %v1774
    %v2047 = vpop.f32.mrb[0].mxu0
    %v2048 = vadd.f32 %v1819, %v2047
    %v2049 = vpop.f32.mrb[0].mxu0
    %v2050 = vpop.f32.mrb[0].mxu0
    %v2051 = vadd.f32 %v1819, %v2050
    %v2052 = vpop.f32.mrb[0].mxu0
    %2053 = vmatprep.mubr.bf16.mxu0 %v1777
    %2054 = vmatmul.mubr.bf16.gmra.mrb[0].mxu0 %v1776
    %v2055 = vpop.f32.mrb[0].mxu0
    %v2056 = vadd.f32 %v1819, %v2055
    %v2057 = vpop.f32.mrb[0].mxu0
    %v2058 = vpop.f32.mrb[0].mxu0
    %v2059 = vadd.f32 %v1819, %v2058
    %v2060 = vpop.f32.mrb[0].mxu0
    %2061 = vmatprep.mubr.bf16.mxu0 %v1779
    %2062 = vmatmul.mubr.bf16.gmra.mrb[0].mxu0 %v1778
    %v2063 = vpop.f32.mrb[0].mxu0
    %v2064 = vadd.f32 %v1819, %v2063
    %v2065 = vpop.f32.mrb[0].mxu0
    %v2066 = vpop.f32.mrb[0].mxu0
    %v2067 = vadd.f32 %v1819, %v2066
    %v2068 = vpop.f32.mrb[0].mxu0
    %2069 = vmatprep.mubr.bf16.mxu0 %v1781
    %2070 = vmatmul.mubr.bf16.gmra.mrb[0].mxu0 %v1780
    %v2071 = vpop.f32.mrb[0].mxu0
    %v2072 = vadd.f32 %v1819, %v2071
    %v2073 = vpop.f32.mrb[0].mxu0
    %v2074 = vpop.f32.mrb[0].mxu0
    %v2075 = vadd.f32 %v1819, %v2074
    %v2076 = vpop.f32.mrb[0].mxu0
    %2077 = vdwg.mxu0
    %v2078 = vmax.f32 %v1952, 0.0
    %v2079 = vmax.f32 %v1955, 0.0
    %v2080 = vmax.f32 %v1960, 0.0
    %v2081 = vmax.f32 %v1963, 0.0
    %v2082 = vmax.f32 %v1968, 0.0
    %v2083 = vmax.f32 %v1971, 0.0
    %v2084 = vmax.f32 %v1976, 0.0
    %v2085 = vmax.f32 %v1979, 0.0
    %v2086 = vmax.f32 %v1984, 0.0
    %v2087 = vmax.f32 %v1987, 0.0
    %v2088 = vmax.f32 %v1992, 0.0
    %v2089 = vmax.f32 %v1995, 0.0
    %v2090 = vmax.f32 %v2000, 0.0
    %v2091 = vmax.f32 %v2003, 0.0
    %v2092 = vmax.f32 %v2008, 0.0
    %v2093 = vmax.f32 %v2011, 0.0
    %v2094 = vmax.f32 %v2016, 0.0
    %v2095 = vmax.f32 %v2019, 0.0
    %v2096 = vmax.f32 %v2024, 0.0
    %v2097 = vmax.f32 %v2027, 0.0
    %v2098 = vmax.f32 %v2032, 0.0
    %v2099 = vmax.f32 %v2035, 0.0
    %v2100 = vmax.f32 %v2040, 0.0
    %v2101 = vmax.f32 %v2043, 0.0
    %v2102 = vmax.f32 %v2048, 0.0
    %v2103 = vmax.f32 %v2051, 0.0
    %v2104 = vmax.f32 %v2056, 0.0
    %v2105 = vmax.f32 %v2059, 0.0
    %v2106 = vmax.f32 %v2064, 0.0
    %v2107 = vmax.f32 %v2067, 0.0
    %v2108 = vmax.f32 %v2072, 0.0
    %v2109 = vmax.f32 %v2075, 0.0
    %v2110 = vpack.c.bf16 %v2079, %v2078
    %v2111 = vpack.c.bf16 %v2081, %v2080
    %v2112 = vpack.c.bf16 %v2083, %v2082
    %v2113 = vpack.c.bf16 %v2085, %v2084
    %v2114 = vpack.c.bf16 %v2087, %v2086
    %v2115 = vpack.c.bf16 %v2089, %v2088
    %v2116 = vpack.c.bf16 %v2091, %v2090
    %v2117 = vpack.c.bf16 %v2093, %v2092
    %v2118 = vpack.c.bf16 %v2095, %v2094
    %v2119 = vpack.c.bf16 %v2097, %v2096
    %v2120 = vpack.c.bf16 %v2099, %v2098
    %v2121 = vpack.c.bf16 %v2101, %v2100
    %v2122 = vpack.c.bf16 %v2103, %v2102
    %v2123 = vpack.c.bf16 %v2105, %v2104
    %v2124 = vpack.c.bf16 %v2107, %v2106
    %v2125 = vpack.c.bf16 %v2109, %v2108
    %v2126 = vld [vmem:[%s7] sm:$0xf]
    %v2127 = vld [vmem:[%s7 + $0x4] sm:$0xf]
    %v2128 = vld [vmem:[%s7 + $0x8] sm:$0xf]
    %v2129 = vld [vmem:[%s7 + $0xc] sm:$0xf]
    %v2130 = vld [vmem:[%s7 + $0x10] sm:$0xf]
    %v2131 = vld [vmem:[%s7 + $0x14] sm:$0xf]
    %v2132 = vld [vmem:[%s7 + $0x18] sm:$0xf]
    %v2133 = vld [vmem:[%s7 + $0x1c] sm:$0xf]
    %v2134 = vld [vmem:[%s7 + $0x20] sm:$0xf]
    %v2135 = vld [vmem:[%s7 + $0x24] sm:$0xf]
    %v2136 = vld [vmem:[%s7 + $0x28] sm:$0xf]
    %v2137 = vld [vmem:[%s7 + $0x2c] sm:$0xf]
    %v2138 = vld [vmem:[%s7 + $0x30] sm:$0xf]
    %v2139 = vld [vmem:[%s7 + $0x34] sm:$0xf]
    %v2140 = vld [vmem:[%s7 + $0x38] sm:$0xf]
    %v2141 = vld [vmem:[%s7 + $0x3c] sm:$0xf]
    %v2142 = vld [vmem:[%s8] sm:$0x1]
    %v2144 = vlaneseq
    %v2145 = vshrl.u32 %v2144, 7
    %v2146 = vsub.s32 0, %v2145
    %v2147 = vrot.slane %v2142, %v2146
    %v2165 = vunpack.c.l.b16 %v2126
    %v2166 = vunpack.c.l.b16 %v2127
    %v2167 = vunpack.c.l.b16 %v2128
    %v2168 = vunpack.c.l.b16 %v2129
    %v2169 = vunpack.c.l.b16 %v2130
    %v2170 = vunpack.c.l.b16 %v2131
    %v2171 = vunpack.c.l.b16 %v2132
    %v2172 = vunpack.c.l.b16 %v2133
    %v2173 = vunpack.c.l.b16 %v2134
    %v2174 = vunpack.c.l.b16 %v2135
    %v2175 = vunpack.c.l.b16 %v2136
    %v2176 = vunpack.c.l.b16 %v2137
    %v2177 = vunpack.c.l.b16 %v2138
    %v2178 = vunpack.c.l.b16 %v2139
    %v2179 = vunpack.c.l.b16 %v2140
    %v2180 = vunpack.c.l.b16 %v2141
    %v2181 = vpack.c.b16 %v2166, %v2165
    %v2182 = vpack.c.b16 %v2168, %v2167
    %v2183 = vpack.c.b16 %v2170, %v2169
    %v2184 = vpack.c.b16 %v2172, %v2171
    %v2185 = vpack.c.b16 %v2174, %v2173
    %v2186 = vpack.c.b16 %v2176, %v2175
    %v2187 = vpack.c.b16 %v2178, %v2177
    %v2188 = vpack.c.b16 %v2180, %v2179
    %2197 = vmatprep.subr.bf16.mxu0 0
    %2198 = vmatpush1.bf16.msra.mxu0 %v2181
    %2199 = vmatprep.subr.bf16.mxu0 0
    %2200 = vmatpush1.bf16.msra.mxu0 %v2182
    %2201 = vmatprep.subr.bf16.mxu0 0
    %2202 = vmatpush1.bf16.msra.mxu0 %v2183
    %2203 = vmatprep.subr.bf16.mxu0 0
    %2204 = vmatpush1.bf16.msra.mxu0 %v2184
    %2205 = vmatprep.subr.bf16.mxu0 0
    %2206 = vmatpush1.bf16.msra.mxu0 %v2185
    %2207 = vmatprep.subr.bf16.mxu0 0
    %2208 = vmatpush1.bf16.msra.mxu0 %v2186
    %2209 = vmatprep.subr.bf16.mxu0 0
    %2210 = vmatpush1.bf16.msra.mxu0 %v2187
    %2211 = vmatprep.subr.bf16.mxu0 0
    %2212 = vmatpush1.bf16.msra.mxu0 %v2188
    %2213 = vmatprep.subr.bf16.mxu0 0
    %2214 = vmatpush1.bf16.msra.mxu0 0
    %2215 = vmatprep.subr.bf16.mxu0 0
    %2216 = vmatpush1.bf16.msra.mxu0 0
    %2217 = vmatprep.subr.bf16.mxu0 0
    %2218 = vmatpush1.bf16.msra.mxu0 0
    %2219 = vmatprep.subr.bf16.mxu0 0
    %2220 = vmatpush1.bf16.msra.mxu0 0
    %2221 = vmatprep.subr.bf16.mxu0 0
    %2222 = vmatpush1.bf16.msra.mxu0 0
    %2223 = vmatprep.subr.bf16.mxu0 0
    %2224 = vmatpush1.bf16.msra.mxu0 0
    %2225 = vmatprep.subr.bf16.mxu0 0
    %2226 = vmatpush1.bf16.msra.mxu0 0
    %2227 = vmatprep.subr.bf16.mxu0 0
    %2228 = vmatpush1.bf16.msra.mxu0 0
    %2229 = vmatprep.mubr.bf16.mxu0 0
    %2230 = vmatmul.mubr.bf16.gmra.mrb[0].mxu0 %v2110
    %v2231 = vpop.f32.mrb[0].mxu0
    %v2232 = vadd.f32 %v2147, %v2231
    %v2233 = vpop.f32.mrb[0].mxu0
    %v2234 = vpop.f32.mrb[0].mxu0
    %v2235 = vadd.f32 %v2147, %v2234
    %v2236 = vpop.f32.mrb[0].mxu0
    %2237 = vmatprep.mubr.bf16.mxu0 0
    %2238 = vmatmul.mubr.bf16.gmra.mrb[0].mxu0 %v2111
    %v2239 = vpop.f32.mrb[0].mxu0
    %v2240 = vadd.f32 %v2147, %v2239
    %v2241 = vpop.f32.mrb[0].mxu0
    %v2242 = vpop.f32.mrb[0].mxu0
    %v2243 = vadd.f32 %v2147, %v2242
    %v2244 = vpop.f32.mrb[0].mxu0
    %2245 = vmatprep.mubr.bf16.mxu0 0
    %2246 = vmatmul.mubr.bf16.gmra.mrb[0].mxu0 %v2112
    %v2247 = vpop.f32.mrb[0].mxu0
    %v2248 = vadd.f32 %v2147, %v2247
    %v2249 = vpop.f32.mrb[0].mxu0
    %v2250 = vpop.f32.mrb[0].mxu0
    %v2251 = vadd.f32 %v2147, %v2250
    %v2252 = vpop.f32.mrb[0].mxu0
    %2253 = vmatprep.mubr.bf16.mxu0 0
    %2254 = vmatmul.mubr.bf16.gmra.mrb[0].mxu0 %v2113
    %v2255 = vpop.f32.mrb[0].mxu0
    %v2256 = vadd.f32 %v2147, %v2255
    %v2257 = vpop.f32.mrb[0].mxu0
    %v2258 = vpop.f32.mrb[0].mxu0
    %v2259 = vadd.f32 %v2147, %v2258
    %v2260 = vpop.f32.mrb[0].mxu0
    %2261 = vmatprep.mubr.bf16.mxu0 0
    %2262 = vmatmul.mubr.bf16.gmra.mrb[0].mxu0 %v2114
    %v2263 = vpop.f32.mrb[0].mxu0
    %v2264 = vadd.f32 %v2147, %v2263
    %v2265 = vpop.f32.mrb[0].mxu0
    %v2266 = vpop.f32.mrb[0].mxu0
    %v2267 = vadd.f32 %v2147, %v2266
    %v2268 = vpop.f32.mrb[0].mxu0
    %2269 = vmatprep.mubr.bf16.mxu0 0
    %2270 = vmatmul.mubr.bf16.gmra.mrb[0].mxu0 %v2115
    %v2271 = vpop.f32.mrb[0].mxu0
    %v2272 = vadd.f32 %v2147, %v2271
    %v2273 = vpop.f32.mrb[0].mxu0
    %v2274 = vpop.f32.mrb[0].mxu0
    %v2275 = vadd.f32 %v2147, %v2274
    %v2276 = vpop.f32.mrb[0].mxu0
    %2277 = vmatprep.mubr.bf16.mxu0 0
    %2278 = vmatmul.mubr.bf16.gmra.mrb[0].mxu0 %v2116
    %v2279 = vpop.f32.mrb[0].mxu0
    %v2280 = vadd.f32 %v2147, %v2279
    %v2281 = vpop.f32.mrb[0].mxu0
    %v2282 = vpop.f32.mrb[0].mxu0
    %v2283 = vadd.f32 %v2147, %v2282
    %v2284 = vpop.f32.mrb[0].mxu0
    %2285 = vmatprep.mubr.bf16.mxu0 0
    %2286 = vmatmul.mubr.bf16.gmra.mrb[0].mxu0 %v2117
    %v2287 = vpop.f32.mrb[0].mxu0
    %v2288 = vadd.f32 %v2147, %v2287
    %v2289 = vpop.f32.mrb[0].mxu0
    %v2290 = vpop.f32.mrb[0].mxu0
    %v2291 = vadd.f32 %v2147, %v2290
    %v2292 = vpop.f32.mrb[0].mxu0
    %2293 = vmatprep.mubr.bf16.mxu0 0
    %2294 = vmatmul.mubr.bf16.gmra.mrb[0].mxu0 %v2118
    %v2295 = vpop.f32.mrb[0].mxu0
    %v2296 = vadd.f32 %v2147, %v2295
    %v2297 = vpop.f32.mrb[0].mxu0
    %v2298 = vpop.f32.mrb[0].mxu0
    %v2299 = vadd.f32 %v2147, %v2298
    %v2300 = vpop.f32.mrb[0].mxu0
    %2301 = vmatprep.mubr.bf16.mxu0 0
    %2302 = vmatmul.mubr.bf16.gmra.mrb[0].mxu0 %v2119
    %v2303 = vpop.f32.mrb[0].mxu0
    %v2304 = vadd.f32 %v2147, %v2303
    %v2305 = vpop.f32.mrb[0].mxu0
    %v2306 = vpop.f32.mrb[0].mxu0
    %v2307 = vadd.f32 %v2147, %v2306
    %v2308 = vpop.f32.mrb[0].mxu0
    %2309 = vmatprep.mubr.bf16.mxu0 0
    %2310 = vmatmul.mubr.bf16.gmra.mrb[0].mxu0 %v2120
    %v2311 = vpop.f32.mrb[0].mxu0
    %v2312 = vadd.f32 %v2147, %v2311
    %v2313 = vpop.f32.mrb[0].mxu0
    %v2314 = vpop.f32.mrb[0].mxu0
    %v2315 = vadd.f32 %v2147, %v2314
    %v2316 = vpop.f32.mrb[0].mxu0
    %2317 = vmatprep.mubr.bf16.mxu0 0
    %2318 = vmatmul.mubr.bf16.gmra.mrb[0].mxu0 %v2121
    %v2319 = vpop.f32.mrb[0].mxu0
    %v2320 = vadd.f32 %v2147, %v2319
    %v2321 = vpop.f32.mrb[0].mxu0
    %v2322 = vpop.f32.mrb[0].mxu0
    %v2323 = vadd.f32 %v2147, %v2322
    %v2324 = vpop.f32.mrb[0].mxu0
    %2325 = vmatprep.mubr.bf16.mxu0 0
    %2326 = vmatmul.mubr.bf16.gmra.mrb[0].mxu0 %v2122
    %v2327 = vpop.f32.mrb[0].mxu0
    %v2328 = vadd.f32 %v2147, %v2327
    %v2329 = vpop.f32.mrb[0].mxu0
    %v2330 = vpop.f32.mrb[0].mxu0
    %v2331 = vadd.f32 %v2147, %v2330
    %v2332 = vpop.f32.mrb[0].mxu0
    %2333 = vmatprep.mubr.bf16.mxu0 0
    %2334 = vmatmul.mubr.bf16.gmra.mrb[0].mxu0 %v2123
    %v2335 = vpop.f32.mrb[0].mxu0
    %v2336 = vadd.f32 %v2147, %v2335
    %v2337 = vpop.f32.mrb[0].mxu0
    %v2338 = vpop.f32.mrb[0].mxu0
    %v2339 = vadd.f32 %v2147, %v2338
    %v2340 = vpop.f32.mrb[0].mxu0
    %2341 = vmatprep.mubr.bf16.mxu0 0
    %2342 = vmatmul.mubr.bf16.gmra.mrb[0].mxu0 %v2124
    %v2343 = vpop.f32.mrb[0].mxu0
    %v2344 = vadd.f32 %v2147, %v2343
    %v2345 = vpop.f32.mrb[0].mxu0
    %v2346 = vpop.f32.mrb[0].mxu0
    %v2347 = vadd.f32 %v2147, %v2346
    %v2348 = vpop.f32.mrb[0].mxu0
    %2349 = vmatprep.mubr.bf16.mxu0 0
    %2350 = vmatmul.mubr.bf16.gmra.mrb[0].mxu0 %v2125
    %v2351 = vpop.f32.mrb[0].mxu0
    %v2352 = vadd.f32 %v2147, %v2351
    %v2353 = vpop.f32.mrb[0].mxu0
    %v2354 = vpop.f32.mrb[0].mxu0
    %v2355 = vadd.f32 %v2147, %v2354
    %v2356 = vpop.f32.mrb[0].mxu0
    %2357 = vdwg.mxu0
    %vm2358 = vcmask 228352
    %v2359 = vsel %vm2358, %v2232, -inf
    %2360 = vmax.xlane.f32.xlu0 %v2359
    %v2361 = vpop.xlane.xlu0 %2360
    %v2362 = vsel %vm2358, %v2235, -inf
    %2363 = vmax.xlane.f32.xlu0 %v2362
    %v2364 = vpop.xlane.xlu0 %2363
    %v2365 = vsel %vm2358, %v2240, -inf
    %2366 = vmax.xlane.f32.xlu0 %v2365
    %v2367 = vpop.xlane.xlu0 %2366
    %v2368 = vsel %vm2358, %v2243, -inf
    %2369 = vmax.xlane.f32.xlu0 %v2368
    %v2370 = vpop.xlane.xlu0 %2369
    %v2371 = vsel %vm2358, %v2248, -inf
    %2372 = vmax.xlane.f32.xlu0 %v2371
    %v2373 = vpop.xlane.xlu0 %2372
    %v2374 = vsel %vm2358, %v2251, -inf
    %2375 = vmax.xlane.f32.xlu0 %v2374
    %v2376 = vpop.xlane.xlu0 %2375
    %v2377 = vsel %vm2358, %v2256, -inf
    %2378 = vmax.xlane.f32.xlu0 %v2377
    %v2379 = vpop.xlane.xlu0 %2378
    %v2380 = vsel %vm2358, %v2259, -inf
    %2381 = vmax.xlane.f32.xlu0 %v2380
    %v2382 = vpop.xlane.xlu0 %2381
    %v2383 = vsel %vm2358, %v2264, -inf
    %2384 = vmax.xlane.f32.xlu0 %v2383
    %v2385 = vpop.xlane.xlu0 %2384
    %v2386 = vsel %vm2358, %v2267, -inf
    %2387 = vmax.xlane.f32.xlu0 %v2386
    %v2388 = vpop.xlane.xlu0 %2387
    %v2389 = vsel %vm2358, %v2272, -inf
    %2390 = vmax.xlane.f32.xlu0 %v2389
    %v2391 = vpop.xlane.xlu0 %2390
    %v2392 = vsel %vm2358, %v2275, -inf
    %2393 = vmax.xlane.f32.xlu0 %v2392
    %v2394 = vpop.xlane.xlu0 %2393
    %v2395 = vsel %vm2358, %v2280, -inf
    %2396 = vmax.xlane.f32.xlu0 %v2395
    %v2397 = vpop.xlane.xlu0 %2396
    %v2398 = vsel %vm2358, %v2283, -inf
    %2399 = vmax.xlane.f32.xlu0 %v2398
    %v2400 = vpop.xlane.xlu0 %2399
    %v2401 = vsel %vm2358, %v2288, -inf
    %2402 = vmax.xlane.f32.xlu0 %v2401
    %v2403 = vpop.xlane.xlu0 %2402
    %v2404 = vsel %vm2358, %v2291, -inf
    %2405 = vmax.xlane.f32.xlu0 %v2404
    %v2406 = vpop.xlane.xlu0 %2405
    %v2407 = vsel %vm2358, %v2296, -inf
    %2408 = vmax.xlane.f32.xlu0 %v2407
    %v2409 = vpop.xlane.xlu0 %2408
    %v2410 = vsel %vm2358, %v2299, -inf
    %2411 = vmax.xlane.f32.xlu0 %v2410
    %v2412 = vpop.xlane.xlu0 %2411
    %v2413 = vsel %vm2358, %v2304, -inf
    %2414 = vmax.xlane.f32.xlu0 %v2413
    %v2415 = vpop.xlane.xlu0 %2414
    %v2416 = vsel %vm2358, %v2307, -inf
    %2417 = vmax.xlane.f32.xlu0 %v2416
    %v2418 = vpop.xlane.xlu0 %2417
    %v2419 = vsel %vm2358, %v2312, -inf
    %2420 = vmax.xlane.f32.xlu0 %v2419
    %v2421 = vpop.xlane.xlu0 %2420
    %v2422 = vsel %vm2358, %v2315, -inf
    %2423 = vmax.xlane.f32.xlu0 %v2422
    %v2424 = vpop.xlane.xlu0 %2423
    %v2425 = vsel %vm2358, %v2320, -inf
    %2426 = vmax.xlane.f32.xlu0 %v2425
    %v2427 = vpop.xlane.xlu0 %2426
    %v2428 = vsel %vm2358, %v2323, -inf
    %2429 = vmax.xlane.f32.xlu0 %v2428
    %v2430 = vpop.xlane.xlu0 %2429
    %v2431 = vsel %vm2358, %v2328, -inf
    %2432 = vmax.xlane.f32.xlu0 %v2431
    %v2433 = vpop.xlane.xlu0 %2432
    %v2434 = vsel %vm2358, %v2331, -inf
    %2435 = vmax.xlane.f32.xlu0 %v2434
    %v2436 = vpop.xlane.xlu0 %2435
    %v2437 = vsel %vm2358, %v2336, -inf
    %2438 = vmax.xlane.f32.xlu0 %v2437
    %v2439 = vpop.xlane.xlu0 %2438
    %v2440 = vsel %vm2358, %v2339, -inf
    %2441 = vmax.xlane.f32.xlu0 %v2440
    %v2442 = vpop.xlane.xlu0 %2441
    %v2443 = vsel %vm2358, %v2344, -inf
    %2444 = vmax.xlane.f32.xlu0 %v2443
    %v2445 = vpop.xlane.xlu0 %2444
    %v2446 = vsel %vm2358, %v2347, -inf
    %2447 = vmax.xlane.f32.xlu0 %v2446
    %v2448 = vpop.xlane.xlu0 %2447
    %v2449 = vsel %vm2358, %v2352, -inf
    %2450 = vmax.xlane.f32.xlu0 %v2449
    %v2451 = vpop.xlane.xlu0 %2450
    %v2452 = vsel %vm2358, %v2355, -inf
    %2453 = vmax.xlane.f32.xlu0 %v2452
    %v2454 = vpop.xlane.xlu0 %2453
    %v2455 = vsub.f32 %v2232, %v2361
    %v2456 = vsub.f32 %v2235, %v2364
    %v2457 = vsub.f32 %v2240, %v2367
    %v2458 = vsub.f32 %v2243, %v2370
    %v2459 = vsub.f32 %v2248, %v2373
    %v2460 = vsub.f32 %v2251, %v2376
    %v2461 = vsub.f32 %v2256, %v2379
    %v2462 = vsub.f32 %v2259, %v2382
    %v2463 = vsub.f32 %v2264, %v2385
    %v2464 = vsub.f32 %v2267, %v2388
    %v2465 = vsub.f32 %v2272, %v2391
    %v2466 = vsub.f32 %v2275, %v2394
    %v2467 = vsub.f32 %v2280, %v2397
    %v2468 = vsub.f32 %v2283, %v2400
    %v2469 = vsub.f32 %v2288, %v2403
    %v2470 = vsub.f32 %v2291, %v2406
    %v2471 = vsub.f32 %v2296, %v2409
    %v2472 = vsub.f32 %v2299, %v2412
    %v2473 = vsub.f32 %v2304, %v2415
    %v2474 = vsub.f32 %v2307, %v2418
    %v2475 = vsub.f32 %v2312, %v2421
    %v2476 = vsub.f32 %v2315, %v2424
    %v2477 = vsub.f32 %v2320, %v2427
    %v2478 = vsub.f32 %v2323, %v2430
    %v2479 = vsub.f32 %v2328, %v2433
    %v2480 = vsub.f32 %v2331, %v2436
    %v2481 = vsub.f32 %v2336, %v2439
    %v2482 = vsub.f32 %v2339, %v2442
    %v2483 = vsub.f32 %v2344, %v2445
    %v2484 = vsub.f32 %v2347, %v2448
    %v2485 = vsub.f32 %v2352, %v2451
    %v2486 = vsub.f32 %v2355, %v2454
    %v2487 = vmul.f32 %v2455, 1.442695
    %v2488 = vpow.pop %v2487
    %v2489 = vmul.f32 %v2456, 1.442695
    %v2490 = vpow.pop %v2489
    %v2491 = vmul.f32 %v2457, 1.442695
    %v2492 = vpow.pop %v2491
    %v2493 = vmul.f32 %v2458, 1.442695
    %v2494 = vpow.pop %v2493
    %v2495 = vmul.f32 %v2459, 1.442695
    %v2496 = vpow.pop %v2495
    %v2497 = vmul.f32 %v2460, 1.442695
    %v2498 = vpow.pop %v2497
    %v2499 = vmul.f32 %v2461, 1.442695
    %v2500 = vpow.pop %v2499
    %v2501 = vmul.f32 %v2462, 1.442695
    %v2502 = vpow.pop %v2501
    %v2503 = vmul.f32 %v2463, 1.442695
    %v2504 = vpow.pop %v2503
    %v2505 = vmul.f32 %v2464, 1.442695
    %v2506 = vpow.pop %v2505
    %v2507 = vmul.f32 %v2465, 1.442695
    %v2508 = vpow.pop %v2507
    %v2509 = vmul.f32 %v2466, 1.442695
    %v2510 = vpow.pop %v2509
    %v2511 = vmul.f32 %v2467, 1.442695
    %v2512 = vpow.pop %v2511
    %v2513 = vmul.f32 %v2468, 1.442695
    %v2514 = vpow.pop %v2513
    %v2515 = vmul.f32 %v2469, 1.442695
    %v2516 = vpow.pop %v2515
    %v2517 = vmul.f32 %v2470, 1.442695
    %v2518 = vpow.pop %v2517
    %v2519 = vmul.f32 %v2471, 1.442695
    %v2520 = vpow.pop %v2519
    %v2521 = vmul.f32 %v2472, 1.442695
    %v2522 = vpow.pop %v2521
    %v2523 = vmul.f32 %v2473, 1.442695
    %v2524 = vpow.pop %v2523
    %v2525 = vmul.f32 %v2474, 1.442695
    %v2526 = vpow.pop %v2525
    %v2527 = vmul.f32 %v2475, 1.442695
    %v2528 = vpow.pop %v2527
    %v2529 = vmul.f32 %v2476, 1.442695
    %v2530 = vpow.pop %v2529
    %v2531 = vmul.f32 %v2477, 1.442695
    %v2532 = vpow.pop %v2531
    %v2533 = vmul.f32 %v2478, 1.442695
    %v2534 = vpow.pop %v2533
    %v2535 = vmul.f32 %v2479, 1.442695
    %v2536 = vpow.pop %v2535
    %v2537 = vmul.f32 %v2480, 1.442695
    %v2538 = vpow.pop %v2537
    %v2539 = vmul.f32 %v2481, 1.442695
    %v2540 = vpow.pop %v2539
    %v2541 = vmul.f32 %v2482, 1.442695
    %v2542 = vpow.pop %v2541
    %v2543 = vmul.f32 %v2483, 1.442695
    %v2544 = vpow.pop %v2543
    %v2545 = vmul.f32 %v2484, 1.442695
    %v2546 = vpow.pop %v2545
    %v2547 = vmul.f32 %v2485, 1.442695
    %v2548 = vpow.pop %v2547
    %v2549 = vmul.f32 %v2486, 1.442695
    %v2550 = vpow.pop %v2549
    %v2551 = vsel %vm2358, %v2488, 0.0
    %2552 = vadd.xlane.f32.xlu0 %v2551
    %v2553 = vpop.xlane.xlu0 %2552
    %v2554 = vsel %vm2358, %v2490, 0.0
    %2555 = vadd.xlane.f32.xlu0 %v2554
    %v2556 = vpop.xlane.xlu0 %2555
    %v2557 = vsel %vm2358, %v2492, 0.0
    %2558 = vadd.xlane.f32.xlu0 %v2557
    %v2559 = vpop.xlane.xlu0 %2558
    %v2560 = vsel %vm2358, %v2494, 0.0
    %2561 = vadd.xlane.f32.xlu0 %v2560
    %v2562 = vpop.xlane.xlu0 %2561
    %v2563 = vsel %vm2358, %v2496, 0.0
    %2564 = vadd.xlane.f32.xlu0 %v2563
    %v2565 = vpop.xlane.xlu0 %2564
    %v2566 = vsel %vm2358, %v2498, 0.0
    %2567 = vadd.xlane.f32.xlu0 %v2566
    %v2568 = vpop.xlane.xlu0 %2567
    %v2569 = vsel %vm2358, %v2500, 0.0
    %2570 = vadd.xlane.f32.xlu0 %v2569
    %v2571 = vpop.xlane.xlu0 %2570
    %v2572 = vsel %vm2358, %v2502, 0.0
    %2573 = vadd.xlane.f32.xlu0 %v2572
    %v2574 = vpop.xlane.xlu0 %2573
    %v2575 = vsel %vm2358, %v2504, 0.0
    %2576 = vadd.xlane.f32.xlu0 %v2575
    %v2577 = vpop.xlane.xlu0 %2576
    %v2578 = vsel %vm2358, %v2506, 0.0
    %2579 = vadd.xlane.f32.xlu0 %v2578
    %v2580 = vpop.xlane.xlu0 %2579
    %v2581 = vsel %vm2358, %v2508, 0.0
    %2582 = vadd.xlane.f32.xlu0 %v2581
    %v2583 = vpop.xlane.xlu0 %2582
    %v2584 = vsel %vm2358, %v2510, 0.0
    %2585 = vadd.xlane.f32.xlu0 %v2584
    %v2586 = vpop.xlane.xlu0 %2585
    %v2587 = vsel %vm2358, %v2512, 0.0
    %2588 = vadd.xlane.f32.xlu0 %v2587
    %v2589 = vpop.xlane.xlu0 %2588
    %v2590 = vsel %vm2358, %v2514, 0.0
    %2591 = vadd.xlane.f32.xlu0 %v2590
    %v2592 = vpop.xlane.xlu0 %2591
    %v2593 = vsel %vm2358, %v2516, 0.0
    %2594 = vadd.xlane.f32.xlu0 %v2593
    %v2595 = vpop.xlane.xlu0 %2594
    %v2596 = vsel %vm2358, %v2518, 0.0
    %2597 = vadd.xlane.f32.xlu0 %v2596
    %v2598 = vpop.xlane.xlu0 %2597
    %v2599 = vsel %vm2358, %v2520, 0.0
    %2600 = vadd.xlane.f32.xlu0 %v2599
    %v2601 = vpop.xlane.xlu0 %2600
    %v2602 = vsel %vm2358, %v2522, 0.0
    %2603 = vadd.xlane.f32.xlu0 %v2602
    %v2604 = vpop.xlane.xlu0 %2603
    %v2605 = vsel %vm2358, %v2524, 0.0
    %2606 = vadd.xlane.f32.xlu0 %v2605
    %v2607 = vpop.xlane.xlu0 %2606
    %v2608 = vsel %vm2358, %v2526, 0.0
    %2609 = vadd.xlane.f32.xlu0 %v2608
    %v2610 = vpop.xlane.xlu0 %2609
    %v2611 = vsel %vm2358, %v2528, 0.0
    %2612 = vadd.xlane.f32.xlu0 %v2611
    %v2613 = vpop.xlane.xlu0 %2612
    %v2614 = vsel %vm2358, %v2530, 0.0
    %2615 = vadd.xlane.f32.xlu0 %v2614
    %v2616 = vpop.xlane.xlu0 %2615
    %v2617 = vsel %vm2358, %v2532, 0.0
    %2618 = vadd.xlane.f32.xlu0 %v2617
    %v2619 = vpop.xlane.xlu0 %2618
    %v2620 = vsel %vm2358, %v2534, 0.0
    %2621 = vadd.xlane.f32.xlu0 %v2620
    %v2622 = vpop.xlane.xlu0 %2621
    %v2623 = vsel %vm2358, %v2536, 0.0
    %2624 = vadd.xlane.f32.xlu0 %v2623
    %v2625 = vpop.xlane.xlu0 %2624
    %v2626 = vsel %vm2358, %v2538, 0.0
    %2627 = vadd.xlane.f32.xlu0 %v2626
    %v2628 = vpop.xlane.xlu0 %2627
    %v2629 = vsel %vm2358, %v2540, 0.0
    %2630 = vadd.xlane.f32.xlu0 %v2629
    %v2631 = vpop.xlane.xlu0 %2630
    %v2632 = vsel %vm2358, %v2542, 0.0
    %2633 = vadd.xlane.f32.xlu0 %v2632
    %v2634 = vpop.xlane.xlu0 %2633
    %v2635 = vsel %vm2358, %v2544, 0.0
    %2636 = vadd.xlane.f32.xlu0 %v2635
    %v2637 = vpop.xlane.xlu0 %2636
    %v2638 = vsel %vm2358, %v2546, 0.0
    %2639 = vadd.xlane.f32.xlu0 %v2638
    %v2640 = vpop.xlane.xlu0 %2639
    %v2641 = vsel %vm2358, %v2548, 0.0
    %2642 = vadd.xlane.f32.xlu0 %v2641
    %v2643 = vpop.xlane.xlu0 %2642
    %v2644 = vsel %vm2358, %v2550, 0.0
    %2645 = vadd.xlane.f32.xlu0 %v2644
    %v2646 = vpop.xlane.xlu0 %2645
    %v2647 = vrcp.pop %v2553
    %v2648 = vrcp.pop %v2556
    %v2649 = vrcp.pop %v2559
    %v2650 = vrcp.pop %v2562
    %v2651 = vrcp.pop %v2565
    %v2652 = vrcp.pop %v2568
    %v2653 = vrcp.pop %v2571
    %v2654 = vrcp.pop %v2574
    %v2655 = vrcp.pop %v2577
    %v2656 = vrcp.pop %v2580
    %v2657 = vrcp.pop %v2583
    %v2658 = vrcp.pop %v2586
    %v2659 = vrcp.pop %v2589
    %v2660 = vrcp.pop %v2592
    %v2661 = vrcp.pop %v2595
    %v2662 = vrcp.pop %v2598
    %v2663 = vrcp.pop %v2601
    %v2664 = vrcp.pop %v2604
    %v2665 = vrcp.pop %v2607
    %v2666 = vrcp.pop %v2610
    %v2667 = vrcp.pop %v2613
    %v2668 = vrcp.pop %v2616
    %v2669 = vrcp.pop %v2619
    %v2670 = vrcp.pop %v2622
    %v2671 = vrcp.pop %v2625
    %v2672 = vrcp.pop %v2628
    %v2673 = vrcp.pop %v2631
    %v2674 = vrcp.pop %v2634
    %v2675 = vrcp.pop %v2637
    %v2676 = vrcp.pop %v2640
    %v2677 = vrcp.pop %v2643
    %v2678 = vrcp.pop %v2646
    %v2679 = vmul.f32 %v2488, %v2647
    %v2680 = vmul.f32 %v2490, %v2648
    %v2681 = vmul.f32 %v2492, %v2649
    %v2682 = vmul.f32 %v2494, %v2650
    %v2683 = vmul.f32 %v2496, %v2651
    %v2684 = vmul.f32 %v2498, %v2652
    %v2685 = vmul.f32 %v2500, %v2653
    %v2686 = vmul.f32 %v2502, %v2654
    %v2687 = vmul.f32 %v2504, %v2655
    %v2688 = vmul.f32 %v2506, %v2656
    %v2689 = vmul.f32 %v2508, %v2657
    %v2690 = vmul.f32 %v2510, %v2658
    %v2691 = vmul.f32 %v2512, %v2659
    %v2692 = vmul.f32 %v2514, %v2660
    %v2693 = vmul.f32 %v2516, %v2661
    %v2694 = vmul.f32 %v2518, %v2662
    %v2695 = vmul.f32 %v2520, %v2663
    %v2696 = vmul.f32 %v2522, %v2664
    %v2697 = vmul.f32 %v2524, %v2665
    %v2698 = vmul.f32 %v2526, %v2666
    %v2699 = vmul.f32 %v2528, %v2667
    %v2700 = vmul.f32 %v2530, %v2668
    %v2701 = vmul.f32 %v2532, %v2669
    %v2702 = vmul.f32 %v2534, %v2670
    %v2703 = vmul.f32 %v2536, %v2671
    %v2704 = vmul.f32 %v2538, %v2672
    %v2705 = vmul.f32 %v2540, %v2673
    %v2706 = vmul.f32 %v2542, %v2674
    %v2707 = vmul.f32 %v2544, %v2675
    %v2708 = vmul.f32 %v2546, %v2676
    %v2709 = vmul.f32 %v2548, %v2677
    %v2710 = vmul.f32 %v2550, %v2678
    %2711 = vst.msk [vmem:[%s9] sm:$0xff] %vm2358, %v2679
    %2712 = vst.msk [vmem:[%s9 + $0x8] sm:$0xff] %vm2358, %v2680
    %2713 = vst.msk [vmem:[%s9 + $0x10] sm:$0xff] %vm2358, %v2681
    %2714 = vst.msk [vmem:[%s9 + $0x18] sm:$0xff] %vm2358, %v2682
    %2715 = vst.msk [vmem:[%s9 + $0x20] sm:$0xff] %vm2358, %v2683
    %2716 = vst.msk [vmem:[%s9 + $0x28] sm:$0xff] %vm2358, %v2684
    %2717 = vst.msk [vmem:[%s9 + $0x30] sm:$0xff] %vm2358, %v2685
    %2718 = vst.msk [vmem:[%s9 + $0x38] sm:$0xff] %vm2358, %v2686
    %2719 = vst.msk [vmem:[%s9 + $0x40] sm:$0xff] %vm2358, %v2687
    %2720 = vst.msk [vmem:[%s9 + $0x48] sm:$0xff] %vm2358, %v2688
    %2721 = vst.msk [vmem:[%s9 + $0x50] sm:$0xff] %vm2358, %v2689
    %2722 = vst.msk [vmem:[%s9 + $0x58] sm:$0xff] %vm2358, %v2690
    %2723 = vst.msk [vmem:[%s9 + $0x60] sm:$0xff] %vm2358, %v2691
    %2724 = vst.msk [vmem:[%s9 + $0x68] sm:$0xff] %vm2358, %v2692
    %2725 = vst.msk [vmem:[%s9 + $0x70] sm:$0xff] %vm2358, %v2693
    %2726 = vst.msk [vmem:[%s9 + $0x78] sm:$0xff] %vm2358, %v2694
    %2727 = vst.msk [vmem:[%s9 + $0x80] sm:$0xff] %vm2358, %v2695
    %2728 = vst.msk [vmem:[%s9 + $0x88] sm:$0xff] %vm2358, %v2696
    %2729 = vst.msk [vmem:[%s9 + $0x90] sm:$0xff] %vm2358, %v2697
    %2730 = vst.msk [vmem:[%s9 + $0x98] sm:$0xff] %vm2358, %v2698
    %2731 = vst.msk [vmem:[%s9 + $0xa0] sm:$0xff] %vm2358, %v2699
    %2732 = vst.msk [vmem:[%s9 + $0xa8] sm:$0xff] %vm2358, %v2700
    %2733 = vst.msk [vmem:[%s9 + $0xb0] sm:$0xff] %vm2358, %v2701
    %2734 = vst.msk [vmem:[%s9 + $0xb8] sm:$0xff] %vm2358, %v2702
    %2735 = vst.msk [vmem:[%s9 + $0xc0] sm:$0xff] %vm2358, %v2703
    %2736 = vst.msk [vmem:[%s9 + $0xc8] sm:$0xff] %vm2358, %v2704
    %2737 = vst.msk [vmem:[%s9 + $0xd0] sm:$0xff] %vm2358, %v2705
    %2738 = vst.msk [vmem:[%s9 + $0xd8] sm:$0xff] %vm2358, %v2706
    %2739 = vst.msk [vmem:[%s9 + $0xe0] sm:$0xff] %vm2358, %v2707
    %2740 = vst.msk [vmem:[%s9 + $0xe8] sm:$0xff] %vm2358, %v2708
    %2741 = vst.msk [vmem:[%s9 + $0xf0] sm:$0xff] %vm2358, %v2709
    %2742 = vst.msk [vmem:[%s9 + $0xf8] sm:$0xff] %vm2358, %v2710
    // Predicated region
    $region42: #{tpu_custom_call.1} parent=1 // pred_check
      _
    $region43: #{tpu_custom_call.1} parent=1 // pred_check_branch
      %2744 = sbr.rel (0) target = $region45
    $region44: #{tpu_custom_call.1} parent=1 // pred_region
      _
    $region45: #{tpu_custom_call.1} parent=1 // pred_fallthru
      _
    // Predicated region
    $region46: #{tpu_custom_call.1} parent=1 // pred_check
      _
    $region47: #{tpu_custom_call.1} parent=1 // pred_check_branch
      %2746 = sbr.rel (0) target = $region49
    $region48: #{tpu_custom_call.1} parent=1 // pred_region
      _
    $region49: #{tpu_custom_call.1} parent=1 // pred_fallthru
      _
    %2747 = vsyncpa [#allocation3], 1

</llo_original>
